<compile_context>
chip_gen: v7x
topology: tpu7x:2x2x1
jax: 0.10.0
libtpu: 0.0.40
codegen_flags: <defaults>
</compile_context>

<pallas_src>
import math

import jax
import jax.numpy as jnp
from jax.experimental import pallas as pl
from jax.experimental.pallas import tpu as pltpu


def build_fourier_ops(a, b):
    """Real-valued operators reproducing torch.fft.rfft2 / irfft2 (norm='ortho').

    Returns
      f_fwd : (2, a*wb, a*b)  [0]=real, [1]=imag rows of the forward rfft2.
      f_inv : (2, a*b, a*wb)  [0]=coeff of Gr, [1]=coeff of Gi for irfft2.
    Flattening is row-major: spatial (p, q) -> p*b + q, frequency
    (ka, kb) -> ka*wb + kb, matching torch's x.view(B, a, b, C).
    """
    wb = b // 2 + 1
    scale = 1.0 / math.sqrt(a * b)

    ka = jnp.arange(a, dtype=jnp.int32)
    kb = jnp.arange(wb, dtype=jnp.int32)
    p = jnp.arange(a, dtype=jnp.int32)
    q = jnp.arange(b, dtype=jnp.int32)

    # fractional phases, reduced mod 1 in integer arithmetic for accuracy
    fa = ((ka[:, None] * p[None, :]) % a).astype(jnp.float32) / a      # (a, a)  [ka, p]
    fb = ((kb[:, None] * q[None, :]) % b).astype(jnp.float32) / b      # (wb, b) [kb, q]
    theta = (2.0 * math.pi) * (fa[:, None, :, None] + fb[None, :, None, :])  # (a, wb, a, b)
    cos_t = jnp.cos(theta)
    sin_t = jnp.sin(theta)

    # forward: X[ka,kb] = scale * sum_{p,q} x[p,q] * exp(-i*theta)
    fwd_r = (cos_t * scale).reshape(a * wb, a * b)
    fwd_i = (-sin_t * scale).reshape(a * wb, a * b)
    f_fwd = jnp.stack([fwd_r, fwd_i], axis=0)                          # (2, a*wb, a*b)

    # inverse: complex inverse DFT along `a` composed with a c2r irfft along
    # `b` (DC / Nyquist half-spectrum columns counted once, the rest twice):
    #   out[p,q] = sum_{ka,kb} mult[kb]*scale*(Gr*cos(theta) - Gi*sin(theta))
    # which matches torch.fft.irfft2 c2r semantics exactly (the spurious
    # imaginary parts of the DC/Nyquist bins drop out since sin(pi*q) = 0).
    mult = jnp.asarray(
        [1.0 if (k == 0 or (b % 2 == 0 and k == b // 2)) else 2.0 for k in range(wb)],
        dtype=jnp.float32)
    inv_r = jnp.transpose(mult[None, :, None, None] * cos_t * scale,
                          (2, 3, 0, 1)).reshape(a * b, a * wb)
    inv_i = jnp.transpose(-mult[None, :, None, None] * sin_t * scale,
                          (2, 3, 0, 1)).reshape(a * b, a * wb)
    f_inv = jnp.stack([inv_r, inv_i], axis=0)                          # (2, a*b, a*wb)
    return f_fwd, f_inv


def sgn_kernel(x_ref, w_ref, ffwd_ref, finv_ref, o_ref):
    """One grid step: a (N=a*b, TC) channels-last slab of one batch element."""
    x = x_ref[...].astype(jnp.float32)        # (N, TC)  -- C in lanes

    # rfft2 as two MXU matmuls: K = a*b, M = a*wb, N = TC
    zr = jnp.dot(ffwd_ref[0], x, preferred_element_type=jnp.float32)   # (awb, TC)
    zi = jnp.dot(ffwd_ref[1], x, preferred_element_type=jnp.float32)   # (awb, TC)

    # complex spectral gate (element-wise, f32, channels stay in lanes)
    wr = w_ref[0]                             # (awb, TC)
    wi = w_ref[1]
    gr = zr * wr - zi * wi
    gi = zr * wi + zi * wr

    # irfft2 as two accumulating MXU matmuls: K = a*wb, M = a*b, N = TC
    out = (jnp.dot(finv_ref[0], gr, preferred_element_type=jnp.float32)
           + jnp.dot(finv_ref[1], gi, preferred_element_type=jnp.float32))
    o_ref[...] = out.astype(o_ref.dtype)


def _pick_channel_tile(C):
    if C % 256 == 0:
        return 256
    if C % 128 == 0:
        return 128
    return C


def spectral_gating_forward(x, complex_weight, spatial_size=None, block_c=None):
    """x: (B, N, C); complex_weight: (h, w, C, 2) with h=a, w=b//2+1."""
    B, N, C = x.shape
    if spatial_size is None:
        a = b = int(math.sqrt(N))
    else:
        a, b = spatial_size
    assert a * b == N, f"spatial size {a}x{b} does not match N={N}"
    wb = b // 2 + 1
    h, wdim, dim, two = complex_weight.shape
    assert h == a and wdim == wb and dim == C and two == 2

    tc = block_c if block_c is not None else _pick_channel_tile(C)
    assert C % tc == 0
    awb = a * wb

    # pack real/imag gate weights as (2, a*wb, C): channels last (lane axis)
    w_packed = jnp.transpose(complex_weight.astype(jnp.float32),
                             (3, 0, 1, 2)).reshape(2, awb, C)
    f_fwd, f_inv = build_fourier_ops(a, b)     # (2, awb, N), (2, N, awb)

    grid = (C // tc, B)   # channel-block outer, batch inner -> weights and
                          # DFT operators keep the same block index across
                          # consecutive inner steps (no re-DMA).

    out = pl.pallas_call(
        sgn_kernel,
        out_shape=jax.ShapeDtypeStruct((B, N, C), jnp.float32),
        grid=grid,
        in_specs=[
            pl.BlockSpec((None, N, tc), lambda cb, bi: (bi, 0, cb)),   # x slab
            pl.BlockSpec((2, awb, tc), lambda cb, bi: (0, 0, cb)),     # gate weights
            pl.BlockSpec((2, awb, N), lambda cb, bi: (0, 0, 0)),       # forward DFT op
            pl.BlockSpec((2, N, awb), lambda cb, bi: (0, 0, 0)),       # inverse DFT op
        ],
        out_specs=pl.BlockSpec((None, N, tc), lambda cb, bi: (bi, 0, cb)),
        compiler_params=pltpu.CompilerParams(
            dimension_semantics=("parallel", "parallel")),
    )(x, w_packed, f_fwd, f_inv)

    return out                                                    # (B, N, C)


if __name__ == "__main__":
    import numpy as np

    def reference(x, complex_weight, a, b):
        B, N, C = x.shape
        xr = x.reshape(B, a, b, C).astype(jnp.float32)
        wc = complex_weight[..., 0] + 1j * complex_weight[..., 1]
        Xf = jnp.fft.rfft2(xr, axes=(1, 2), norm="ortho") * wc[None]
        return jnp.fft.irfft2(Xf, s=(a, b), axes=(1, 2), norm="ortho").reshape(B, N, C)

    key = jax.random.PRNGKey(0)

    # SpectFormer geometry: img 256 / patch 16 -> a = b = 16, h = 16, w = 9.
    # First case: tiny demo (C=4).  Second: C=256 exercises the lane-dense
    # channel-blocked path (TC=256).
    for (B, C) in [(2, 4), (2, 256)]:
        a = b = 16
        N = a * b
        wb = b // 2 + 1
        key, kx, kw = jax.random.split(key, 3)
        x = jax.random.normal(kx, (B, N, C), dtype=jnp.float32)
        cw = jax.random.normal(kw, (a, wb, C, 2), dtype=jnp.float32) * 0.02

        out = jax.block_until_ready(spectral_gating_forward(x, cw))
        ref = jax.block_until_ready(reference(x, cw, a, b))

        assert out.shape == (B, N, C) and out.dtype == jnp.float32
        err = float(np.max(np.abs(np.asarray(out) - np.asarray(ref))))
        assert np.allclose(np.asarray(out), np.asarray(ref), rtol=2e-2, atol=2e-2), (
            f"mismatch B={B} C={C} max_abs_err={err}")

    print("KERNEL_OK")
</pallas_src>

<mosaic_0001>
module attributes {stable_mosaic.version = 11 : i64} {
  func.func @sgn_kernel(%arg0: i32, %arg1: i32, %arg2: memref<1x256x4xf32, #tpu.memory_space<vmem>>, %arg3: memref<2x144x4xf32, #tpu.memory_space<vmem>>, %arg4: memref<2x144x256xf32, #tpu.memory_space<vmem>>, %arg5: memref<2x256x144xf32, #tpu.memory_space<vmem>>, %arg6: memref<1x256x4xf32, #tpu.memory_space<vmem>>) attributes {dimension_semantics = [#tpu.dimension_semantics<parallel>, #tpu.dimension_semantics<parallel>], iteration_bounds = array<i64: 1, 2>, scalar_prefetch = 0 : i64, scratch_operands = 0 : i64, tpu.core_type = #tpu.core_type<tc>, window_params = [{transform_indices = @transform_0, window_bounds = array<i64: 1, 256, 4>}, {transform_indices = @transform_1, window_bounds = array<i64: 2, 144, 4>}, {pipeline_mode = #tpu.pipeline_mode<synchronous>, transform_indices = @transform_2, window_bounds = array<i64: 2, 144, 256>}, {pipeline_mode = #tpu.pipeline_mode<synchronous>, transform_indices = @transform_3, window_bounds = array<i64: 2, 256, 144>}, {transform_indices = @transform_4, window_bounds = array<i64: 1, 256, 4>}]} {
    %c0 = arith.constant 0 : index
    %c0_0 = arith.constant 0 : index
    %c0_1 = arith.constant 0 : index
    %0 = vector.load %arg2[%c0, %c0_0, %c0_1] : memref<1x256x4xf32, #tpu.memory_space<vmem>>, vector<1x256x4xf32>
    %1 = vector.shape_cast %0 : vector<1x256x4xf32> to vector<256x4xf32>
    %c0_2 = arith.constant 0 : index
    %c0_3 = arith.constant 0 : index
    %c0_4 = arith.constant 0 : index
    %2 = vector.load %arg4[%c0_2, %c0_3, %c0_4] : memref<2x144x256xf32, #tpu.memory_space<vmem>>, vector<1x144x256xf32>
    %3 = vector.shape_cast %2 : vector<1x144x256xf32> to vector<144x256xf32>
    %cst = arith.constant dense<0.000000e+00> : vector<144x4xf32>
    %4 = tpu.matmul %3, %1, %cst {dimension_numbers = #tpu.dot_dimension_numbers<[1], [0], [0], [1], [0, 0, 1, 1], [], []>} : vector<144x256xf32>, vector<256x4xf32>, vector<144x4xf32> -> vector<144x4xf32>
    %c1 = arith.constant 1 : index
    %c0_5 = arith.constant 0 : index
    %c0_6 = arith.constant 0 : index
    %5 = vector.load %arg4[%c1, %c0_5, %c0_6] : memref<2x144x256xf32, #tpu.memory_space<vmem>>, vector<1x144x256xf32>
    %6 = vector.shape_cast %5 : vector<1x144x256xf32> to vector<144x256xf32>
    %cst_7 = arith.constant dense<0.000000e+00> : vector<144x4xf32>
    %7 = tpu.matmul %6, %1, %cst_7 {dimension_numbers = #tpu.dot_dimension_numbers<[1], [0], [0], [1], [0, 0, 1, 1], [], []>} : vector<144x256xf32>, vector<256x4xf32>, vector<144x4xf32> -> vector<144x4xf32>
    %c0_8 = arith.constant 0 : index
    %c0_9 = arith.constant 0 : index
    %c0_10 = arith.constant 0 : index
    %8 = vector.load %arg3[%c0_8, %c0_9, %c0_10] : memref<2x144x4xf32, #tpu.memory_space<vmem>>, vector<1x144x4xf32>
    %9 = vector.shape_cast %8 : vector<1x144x4xf32> to vector<144x4xf32>
    %c1_11 = arith.constant 1 : index
    %c0_12 = arith.constant 0 : index
    %c0_13 = arith.constant 0 : index
    %10 = vector.load %arg3[%c1_11, %c0_12, %c0_13] : memref<2x144x4xf32, #tpu.memory_space<vmem>>, vector<1x144x4xf32>
    %11 = vector.shape_cast %10 : vector<1x144x4xf32> to vector<144x4xf32>
    %12 = arith.mulf %4, %9 : vector<144x4xf32>
    %13 = arith.mulf %7, %11 : vector<144x4xf32>
    %14 = arith.subf %12, %13 : vector<144x4xf32>
    %15 = arith.mulf %4, %11 : vector<144x4xf32>
    %16 = arith.mulf %7, %9 : vector<144x4xf32>
    %17 = arith.addf %15, %16 : vector<144x4xf32>
    %c0_14 = arith.constant 0 : index
    %c0_15 = arith.constant 0 : index
    %c0_16 = arith.constant 0 : index
    %18 = vector.load %arg5[%c0_14, %c0_15, %c0_16] : memref<2x256x144xf32, #tpu.memory_space<vmem>>, vector<1x256x144xf32>
    %19 = vector.shape_cast %18 : vector<1x256x144xf32> to vector<256x144xf32>
    %cst_17 = arith.constant dense<0.000000e+00> : vector<256x4xf32>
    %20 = tpu.matmul %19, %14, %cst_17 {dimension_numbers = #tpu.dot_dimension_numbers<[1], [0], [0], [1], [0, 0, 1, 1], [], []>} : vector<256x144xf32>, vector<144x4xf32>, vector<256x4xf32> -> vector<256x4xf32>
    %c1_18 = arith.constant 1 : index
    %c0_19 = arith.constant 0 : index
    %c0_20 = arith.constant 0 : index
    %21 = vector.load %arg5[%c1_18, %c0_19, %c0_20] : memref<2x256x144xf32, #tpu.memory_space<vmem>>, vector<1x256x144xf32>
    %22 = vector.shape_cast %21 : vector<1x256x144xf32> to vector<256x144xf32>
    %cst_21 = arith.constant dense<0.000000e+00> : vector<256x4xf32>
    %23 = tpu.matmul %22, %17, %cst_21 {dimension_numbers = #tpu.dot_dimension_numbers<[1], [0], [0], [1], [0, 0, 1, 1], [], []>} : vector<256x144xf32>, vector<144x4xf32>, vector<256x4xf32> -> vector<256x4xf32>
    %24 = arith.addf %20, %23 : vector<256x4xf32>
    %c0_22 = arith.constant 0 : index
    %c0_23 = arith.constant 0 : index
    %c0_24 = arith.constant 0 : index
    %25 = vector.load %arg6[%c0_22, %c0_23, %c0_24] : memref<1x256x4xf32, #tpu.memory_space<vmem>>, vector<1x256x4xf32>
    %26 = vector.shape_cast %25 : vector<1x256x4xf32> to vector<256x4xf32>
    %27 = vector.shape_cast %24 : vector<256x4xf32> to vector<1x256x4xf32>
    tpu.vector_store %arg6[%c0_22, %c0_23, %c0_24], %27 {strides = array<i32>} : memref<1x256x4xf32, #tpu.memory_space<vmem>>, vector<1x256x4xf32>,
    return
  }
  func.func @transform_0(%arg0: i32, %arg1: i32) -> (i32, i32, i32) {
    %c0_i32 = arith.constant 0 : i32
    %c0_i32_0 = arith.constant 0 : i32
    return %arg1, %c0_i32, %arg0 : i32, i32, i32
  }
  func.func @transform_1(%arg0: i32, %arg1: i32) -> (i32, i32, i32) {
    %c0_i32 = arith.constant 0 : i32
    %c0_i32_0 = arith.constant 0 : i32
    %c0_i32_1 = arith.constant 0 : i32
    return %c0_i32, %c0_i32_0, %arg0 : i32, i32, i32
  }
  func.func @transform_2(%arg0: i32, %arg1: i32) -> (i32, i32, i32) {
    %c0_i32 = arith.constant 0 : i32
    %c0_i32_0 = arith.constant 0 : i32
    %c0_i32_1 = arith.constant 0 : i32
    %c0_i32_2 = arith.constant 0 : i32
    return %c0_i32, %c0_i32_0, %c0_i32_1 : i32, i32, i32
  }
  func.func @transform_3(%arg0: i32, %arg1: i32) -> (i32, i32, i32) {
    %c0_i32 = arith.constant 0 : i32
    %c0_i32_0 = arith.constant 0 : i32
    %c0_i32_1 = arith.constant 0 : i32
    %c0_i32_2 = arith.constant 0 : i32
    return %c0_i32, %c0_i32_0, %c0_i32_1 : i32, i32, i32
  }
  func.func @transform_4(%arg0: i32, %arg1: i32) -> (i32, i32, i32) {
    %c0_i32 = arith.constant 0 : i32
    %c0_i32_0 = arith.constant 0 : i32
    return %arg1, %c0_i32, %arg0 : i32, i32, i32
  }
}

</mosaic_0001>

<llo_original>
// kernel: tpu_custom_call.1
$region0: #{tpu_custom_call.1}
  #allocation0 [shape = 'u32[]', space=smem, size = 0x4, offset = 0x4, fixed_abs, tag = 'smem constant byte address 0x4 - core index']
  #allocation1 [shape = 'u32[144,128]{1,0:T(1,128)}', space=vmem, size = 0x12000, scoped, tag = 'internal scratch']
  %s0 = inlined_call_operand.vmem [shape: f32[2,256,4], index: 0, kind: input, shape index: {}]
  %s1 = inlined_call_operand.vmem [shape: f32[2,144,4], index: 1, kind: input, shape index: {}]
  %s2 = inlined_call_operand.vmem [shape: f32[2,144,256], index: 2, kind: input, shape index: {}]
  %s3 = inlined_call_operand.vmem [shape: f32[2,256,144], index: 3, kind: input, shape index: {}]
  %s4 = inlined_call_operand.vmem [shape: f32[2,256,4], index: 4, kind: output, shape index: {}]
  %s5 = sld [smem:[#allocation0]]
  $region49: #{tpu_custom_call.1} parent=0
    _
  %s7 = ssub.s32 1, %s5
  %s8 = scalar_select 0, %s7, %s5
  loop: start=0, step=1, limit=4
  $region2: #{tpu_custom_call.1} parent=0 // loop_pre_header
    _
  $region3: #{tpu_custom_call.1} parent=0 // loop_header
    %s10 = sphi 0, %s14
    %p11 = scmp.ge.s32.totalorder %s10, 4
    %s17 = sphi 0, %s29
    %s18 = sphi 0, %s25
    %s19 = sphi 0, %s17
    %s20 = sphi 0, %s18
    %s21 = sphi 0, %s19
    %s22 = sphi 0, %s20
    %s34 = sphi 0, %s36
    %s37 = sphi 0, %s34
    %s38 = sphi 0, %s37
    %s54 = sphi 0, %s38
    %s60 = sphi 0, %s62
    %s63 = sphi 0, %s60
    %s64 = sphi 0, %s63
    %s80 = sphi 0, %s64
    %s84 = sphi 0, %s84
    %s86 = sphi 0, %s84
    %s87 = sphi 0, %s86
    %s101 = sphi 0, %s87
    %s105 = sphi 0, %s105
    %s107 = sphi 0, %s105
    %s108 = sphi 0, %s107
    %s122 = sphi 0, %s108
    %s130 = sphi 0, %s132
    %s133 = sphi 0, %s130
    %s134 = sphi 0, %s133
    %s150 = sphi 0, %s134
  $region4: #{tpu_custom_call.1} parent=0 // loop_header_branch
    %13 = sbr.rel (%p11) target = $region8
  $region5: #{tpu_custom_call.1} parent=0 // loop_body
    %s15 = ssub.s32 %s10, 1
    %s16 = ssub.s32 %s10, 2
    %s23 = sadd.s32 1, %s18
    %p24 = scmp.ge.s32.totalorder %s23, 2
    %s25 = scalar_select %p24, 0, %s23
    %s26 = sadd.s32 1, %s17
    %s27 = scalar_select %p24, %s26, %s17
    %p28 = scmp.ge.s32.totalorder %s27, 1
    %s29 = scalar_select %p28, 0, %s27
    %s30 = ssub.s32 %s18, %s25
    %s31 = ssub.s32 %s17, %s29
    %s32 = sor.u32 %s30, %s31
    %p33 = scmp.eq.s32.totalorder %s32, 0
    %s35 = sadd.s32 %s34, 1
    %s36 = scalar_select %p33, %s34, %s35
    %p39 = pneg %p33
    %p40 = scmp.eq.s32.totalorder %s10, 1
    %p41 = por %p39, %p40
    %p42 = scmp.ne.s32.totalorder %s34, %s37
    %p43 = scmp.eq.s32.totalorder %s10, 0
    %p44 = por %p42, %p43
    %p45 = scmp.ne.s32.totalorder %s34, %s37
    %p46 = scmp.eq.s32.totalorder %s15, 1
    %p47 = por %p45, %p46
    %p48 = scmp.ne.s32.totalorder %s37, %s38
    %p49 = scmp.eq.s32.totalorder %s15, 0
    %p50 = por %p48, %p49
    %p51 = scmp.ne.s32.totalorder %s37, %s38
    %p52 = scmp.eq.s32.totalorder %s16, 1
    %p53 = por %p51, %p52
    %p55 = scmp.ne.s32.totalorder %s38, %s54
    %p56 = scmp.eq.s32.totalorder %s16, 0
    %p57 = por %p55, %p56
    %s58 = ssub.s32 %s17, %s29
    %p59 = scmp.eq.s32.totalorder %s58, 0
    %s61 = sadd.s32 %s60, 1
    %s62 = scalar_select %p59, %s60, %s61
    %p65 = pneg %p59
    %p66 = scmp.eq.s32.totalorder %s10, 1
    %p67 = por %p65, %p66
    %p68 = scmp.ne.s32.totalorder %s60, %s63
    %p69 = scmp.eq.s32.totalorder %s10, 0
    %p70 = por %p68, %p69
    %p71 = scmp.ne.s32.totalorder %s60, %s63
    %p72 = scmp.eq.s32.totalorder %s15, 1
    %p73 = por %p71, %p72
    %p74 = scmp.ne.s32.totalorder %s63, %s64
    %p75 = scmp.eq.s32.totalorder %s15, 0
    %p76 = por %p74, %p75
    %p77 = scmp.ne.s32.totalorder %s63, %s64
    %p78 = scmp.eq.s32.totalorder %s16, 1
    %p79 = por %p77, %p78
    %p81 = scmp.ne.s32.totalorder %s64, %s80
    %p82 = scmp.eq.s32.totalorder %s16, 0
    %p83 = por %p81, %p82
    %s85 = sadd.s32 %s84, 1
    %p88 = scmp.eq.s32.totalorder %s10, 1
    %p89 = scmp.ne.s32.totalorder %s84, %s86
    %p90 = scmp.eq.s32.totalorder %s10, 0
    %p91 = por %p89, %p90
    %p92 = scmp.ne.s32.totalorder %s84, %s86
    %p93 = scmp.eq.s32.totalorder %s15, 1
    %p94 = por %p92, %p93
    %p95 = scmp.ne.s32.totalorder %s86, %s87
    %p96 = scmp.eq.s32.totalorder %s15, 0
    %p97 = por %p95, %p96
    %p98 = scmp.ne.s32.totalorder %s86, %s87
    %p99 = scmp.eq.s32.totalorder %s16, 1
    %p100 = por %p98, %p99
    %p102 = scmp.ne.s32.totalorder %s87, %s101
    %p103 = scmp.eq.s32.totalorder %s16, 0
    %p104 = por %p102, %p103
    %s106 = sadd.s32 %s105, 1
    %p109 = scmp.eq.s32.totalorder %s10, 1
    %p110 = scmp.ne.s32.totalorder %s105, %s107
    %p111 = scmp.eq.s32.totalorder %s10, 0
    %p112 = por %p110, %p111
    %p113 = scmp.ne.s32.totalorder %s105, %s107
    %p114 = scmp.eq.s32.totalorder %s15, 1
    %p115 = por %p113, %p114
    %p116 = scmp.ne.s32.totalorder %s107, %s108
    %p117 = scmp.eq.s32.totalorder %s15, 0
    %p118 = por %p116, %p117
    %p119 = scmp.ne.s32.totalorder %s107, %s108
    %p120 = scmp.eq.s32.totalorder %s16, 1
    %p121 = por %p119, %p120
    %p123 = scmp.ne.s32.totalorder %s108, %s122
    %p124 = scmp.eq.s32.totalorder %s16, 0
    %p125 = por %p123, %p124
    %s126 = ssub.s32 %s18, %s25
    %s127 = ssub.s32 %s17, %s29
    %s128 = sor.u32 %s126, %s127
    %p129 = scmp.eq.s32.totalorder %s128, 0
    %s131 = sadd.s32 %s130, 1
    %s132 = scalar_select %p129, %s130, %s131
    %p135 = pneg %p129
    %p136 = scmp.eq.s32.totalorder %s10, 1
    %p137 = por %p135, %p136
    %p138 = scmp.ne.s32.totalorder %s130, %s133
    %p139 = scmp.eq.s32.totalorder %s10, 0
    %p140 = por %p138, %p139
    %p141 = scmp.ne.s32.totalorder %s130, %s133
    %p142 = scmp.eq.s32.totalorder %s15, 1
    %p143 = por %p141, %p142
    %p144 = scmp.ne.s32.totalorder %s133, %s134
    %p145 = scmp.eq.s32.totalorder %s15, 0
    %p146 = por %p144, %p145
    %p147 = scmp.ne.s32.totalorder %s133, %s134
    %p148 = scmp.eq.s32.totalorder %s16, 1
    %p149 = por %p147, %p148
    %p151 = scmp.ne.s32.totalorder %s134, %s150
    %p152 = scmp.eq.s32.totalorder %s16, 0
    %p153 = por %p151, %p152
    %p154 = scmp.le.s32.totalorder 1, %s10
    %p155 = scmp.lt.s32.totalorder %s10, 3
    %p156 = pnand %p154, %p155
    %p157 = pneg %p156
    // Predicated region
    $region9: #{tpu_custom_call.1} parent=5 // pred_check
      _
    $region10: #{tpu_custom_call.1} parent=5 // pred_check_branch
      %159 = sbr.rel (%p156) target = $region12
    $region11: #{tpu_custom_call.1} parent=5 // pred_region
      %s160 = ssub.s32 %s10, 1
      // Predicated region
      $region13: #{tpu_custom_call.1} parent=11 // pred_check
        %p161 = pneg %p76
      $region14: #{tpu_custom_call.1} parent=11 // pred_check_branch
        %163 = sbr.rel (%p161) target = $region16
      $region15: #{tpu_custom_call.1} parent=11 // pred_region
        %p164 = scmp.lt.s32.totalorder %s19, 0
        %s165 = scalar_select %p164, %s19, 0
        %s166 = smul.addr %s165, 8
        %s167 = scalar_lea.vmem %s1, %s166
      $region16: #{tpu_custom_call.1} parent=11 // pred_fallthru
        _
      // Predicated region
      $region17: #{tpu_custom_call.1} parent=11 // pred_check
        %p168 = pneg %p97
      $region18: #{tpu_custom_call.1} parent=11 // pred_check_branch
        %170 = sbr.rel (%p168) target = $region20
      $region19: #{tpu_custom_call.1} parent=11 // pred_region
        _
      $region20: #{tpu_custom_call.1} parent=11 // pred_fallthru
        _
      // Predicated region
      $region21: #{tpu_custom_call.1} parent=11 // pred_check
        %p171 = pneg %p118
      $region22: #{tpu_custom_call.1} parent=11 // pred_check_branch
        %173 = sbr.rel (%p171) target = $region24
      $region23: #{tpu_custom_call.1} parent=11 // pred_region
        _
      $region24: #{tpu_custom_call.1} parent=11 // pred_fallthru
        _
    $region12: #{tpu_custom_call.1} parent=5 // pred_fallthru
      _
    %p174 = scmp.lt.s32.totalorder %s10, 2
    // Predicated region
    $region25: #{tpu_custom_call.1} parent=5 // pred_check
      %p175 = pneg %p174
    $region26: #{tpu_custom_call.1} parent=5 // pred_check_branch
      %177 = sbr.rel (%p175) target = $region28
    $region27: #{tpu_custom_call.1} parent=5 // pred_region
      // Predicated region
      $region29: #{tpu_custom_call.1} parent=27 // pred_check
        %p178 = pneg %p44
      $region30: #{tpu_custom_call.1} parent=27 // pred_check_branch
        %180 = sbr.rel (%p178) target = $region32
      $region31: #{tpu_custom_call.1} parent=27 // pred_region
        %p181 = scmp.lt.s32.totalorder %s18, 1
        %s182 = scalar_select %p181, %s18, 1
        %p183 = scmp.lt.s32.totalorder %s17, 0
        %s184 = scalar_select %p183, %s17, 0
        %s185 = smul.addr %s182, 32
        %s186 = sadd.s32 %s184, %s185
        %s187 = smul.addr %s186, 8
        %s188 = scalar_lea.vmem %s0, %s187
      $region32: #{tpu_custom_call.1} parent=27 // pred_fallthru
        _
    $region28: #{tpu_custom_call.1} parent=5 // pred_fallthru
      _
    %p189 = scmp.le.s32.totalorder 1, %s10
    %p190 = scmp.lt.s32.totalorder %s10, 3
    %p191 = pnand %p189, %p190
    %p192 = pneg %p191
    // Predicated region
    $region33: #{tpu_custom_call.1} parent=5 // pred_check
      _
    $region34: #{tpu_custom_call.1} parent=5 // pred_check_branch
      %194 = sbr.rel (%p191) target = $region36
    $region35: #{tpu_custom_call.1} parent=5 // pred_region
      %s195 = ssub.s32 %s10, 1
      %p196 = scmp.lt.s32.totalorder %s20, 1
      %s197 = scalar_select %p196, %s20, 1
      %p198 = scmp.lt.s32.totalorder %s19, 0
      %s199 = scalar_select %p198, %s19, 0
      %s200 = smul.addr %s197, 32
      %s201 = sadd.s32 %s199, %s200
      %s202 = smul.addr %s201, 8
      %s203 = scalar_lea.vmem %s0, %s202
      %p204 = pneg %p50
      %p205 = pneg %p47
      %p206 = scmp.lt.s32.totalorder %s19, 0
      %s207 = scalar_select %p206, %s19, 0
      %s208 = smul.addr %s207, 8
      %s209 = scalar_lea.vmem %s1, %s208
      %p210 = pneg %p76
      %p211 = pneg %p73
      %p212 = pneg %p97
      %p213 = pneg %p94
      %p214 = pneg %p118
      %p215 = pneg %p115
      %p216 = pneg %p146
      %p217 = pneg %p143
      %p218 = scmp.lt.s32.totalorder %s20, 1
      %s219 = scalar_select %p218, %s20, 1
      %p220 = scmp.lt.s32.totalorder %s19, 0
      %s221 = scalar_select %p220, %s19, 0
      %s222 = smul.addr %s219, 32
      %s223 = sadd.s32 %s221, %s222
      %s224 = smul.addr %s223, 8
      %s225 = scalar_lea.vmem %s4, %s224
      %p226 = scmp.lt.s32.totalorder %s20, 1
      %s227 = scalar_select %p226, %s20, 1
      %p228 = scmp.lt.s32.totalorder %s19, 0
      %s229 = scalar_select %p228, %s19, 0
      %s230 = smul.addr %s227, 32
      %s231 = sadd.s32 %s229, %s230
      %s232 = smul.addr %s231, 8
      %s233 = scalar_lea.vmem %s0, %s232
      %p234 = scmp.lt.s32.totalorder %s19, 0
      %s235 = scalar_select %p234, %s19, 0
      %s236 = smul.addr %s235, 8
      %s237 = scalar_lea.vmem %s1, %s236
      %p238 = scmp.lt.s32.totalorder %s20, 1
      %s239 = scalar_select %p238, %s20, 1
      %p240 = scmp.lt.s32.totalorder %s19, 0
      %s241 = scalar_select %p240, %s19, 0
      %s242 = smul.addr %s239, 32
      %s243 = sadd.s32 %s241, %s242
      %s244 = smul.addr %s243, 8
      %s245 = scalar_lea.vmem %s4, %s244
      %v246 = vld [vmem:[%s233] sm:$0xff]
      %v247 = vld [vmem:[%s233 + $0x8] sm:$0xff]
      %v248 = vld [vmem:[%s233 + $0x10] sm:$0xff]
      %v249 = vld [vmem:[%s233 + $0x18] sm:$0xff]
      %v250 = vld [vmem:[%s233 + $0x20] sm:$0xff]
      %v251 = vld [vmem:[%s233 + $0x28] sm:$0xff]
      %v252 = vld [vmem:[%s233 + $0x30] sm:$0xff]
      %v253 = vld [vmem:[%s233 + $0x38] sm:$0xff]
      %v254 = vld [vmem:[%s233 + $0x40] sm:$0xff]
      %v255 = vld [vmem:[%s233 + $0x48] sm:$0xff]
      %v256 = vld [vmem:[%s233 + $0x50] sm:$0xff]
      %v257 = vld [vmem:[%s233 + $0x58] sm:$0xff]
      %v258 = vld [vmem:[%s233 + $0x60] sm:$0xff]
      %v259 = vld [vmem:[%s233 + $0x68] sm:$0xff]
      %v260 = vld [vmem:[%s233 + $0x70] sm:$0xff]
      %v261 = vld [vmem:[%s233 + $0x78] sm:$0xff]
      %v262 = vld [vmem:[%s233 + $0x80] sm:$0xff]
      %v263 = vld [vmem:[%s233 + $0x88] sm:$0xff]
      %v264 = vld [vmem:[%s233 + $0x90] sm:$0xff]
      %v265 = vld [vmem:[%s233 + $0x98] sm:$0xff]
      %v266 = vld [vmem:[%s233 + $0xa0] sm:$0xff]
      %v267 = vld [vmem:[%s233 + $0xa8] sm:$0xff]
      %v268 = vld [vmem:[%s233 + $0xb0] sm:$0xff]
      %v269 = vld [vmem:[%s233 + $0xb8] sm:$0xff]
      %v270 = vld [vmem:[%s233 + $0xc0] sm:$0xff]
      %v271 = vld [vmem:[%s233 + $0xc8] sm:$0xff]
      %v272 = vld [vmem:[%s233 + $0xd0] sm:$0xff]
      %v273 = vld [vmem:[%s233 + $0xd8] sm:$0xff]
      %v274 = vld [vmem:[%s233 + $0xe0] sm:$0xff]
      %v275 = vld [vmem:[%s233 + $0xe8] sm:$0xff]
      %v276 = vld [vmem:[%s233 + $0xf0] sm:$0xff]
      %v277 = vld [vmem:[%s233 + $0xf8] sm:$0xff]
      %v278 = vld [vmem:[%s2] sm:$0xff]
      %v279 = vld [vmem:[%s2 + $0x8] sm:$0xff]
      %v280 = vld [vmem:[%s2 + $0x10] sm:$0xff]
      %v281 = vld [vmem:[%s2 + $0x18] sm:$0xff]
      %v282 = vld [vmem:[%s2 + $0x20] sm:$0xff]
      %v283 = vld [vmem:[%s2 + $0x28] sm:$0xff]
      %v284 = vld [vmem:[%s2 + $0x30] sm:$0xff]
      %v285 = vld [vmem:[%s2 + $0x38] sm:$0xff]
      %v286 = vld [vmem:[%s2 + $0x40] sm:$0xff]
      %v287 = vld [vmem:[%s2 + $0x48] sm:$0xff]
      %v288 = vld [vmem:[%s2 + $0x50] sm:$0xff]
      %v289 = vld [vmem:[%s2 + $0x58] sm:$0xff]
      %v290 = vld [vmem:[%s2 + $0x60] sm:$0xff]
      %v291 = vld [vmem:[%s2 + $0x68] sm:$0xff]
      %v292 = vld [vmem:[%s2 + $0x70] sm:$0xff]
      %v293 = vld [vmem:[%s2 + $0x78] sm:$0xff]
      %v294 = vld [vmem:[%s2 + $0x80] sm:$0xff]
      %v295 = vld [vmem:[%s2 + $0x88] sm:$0xff]
      %v296 = vld [vmem:[%s2 + $0x90] sm:$0xff]
      %v297 = vld [vmem:[%s2 + $0x98] sm:$0xff]
      %v298 = vld [vmem:[%s2 + $0xa0] sm:$0xff]
      %v299 = vld [vmem:[%s2 + $0xa8] sm:$0xff]
      %v300 = vld [vmem:[%s2 + $0xb0] sm:$0xff]
      %v301 = vld [vmem:[%s2 + $0xb8] sm:$0xff]
      %v302 = vld [vmem:[%s2 + $0xc0] sm:$0xff]
      %v303 = vld [vmem:[%s2 + $0xc8] sm:$0xff]
      %v304 = vld [vmem:[%s2 + $0xd0] sm:$0xff]
      %v305 = vld [vmem:[%s2 + $0xd8] sm:$0xff]
      %v306 = vld [vmem:[%s2 + $0xe0] sm:$0xff]
      %v307 = vld [vmem:[%s2 + $0xe8] sm:$0xff]
      %v308 = vld [vmem:[%s2 + $0xf0] sm:$0xff]
      %v309 = vld [vmem:[%s2 + $0xf8] sm:$0xff]
      %v310 = vld [vmem:[%s2 + $0x100] sm:$0xff]
      %v311 = vld [vmem:[%s2 + $0x108] sm:$0xff]
      %v312 = vld [vmem:[%s2 + $0x110] sm:$0xff]
      %v313 = vld [vmem:[%s2 + $0x118] sm:$0xff]
      %314 = vmatprep.subr.mxu0 0.0
      %315 = vmatpush1.msra.mxu0 %v246
      %316 = vmatprep.subr.mxu0 0.0
      %317 = vmatpush1.msra.mxu0 %v247
      %318 = vmatprep.subr.mxu0 0.0
      %319 = vmatpush1.msra.mxu0 %v248
      %320 = vmatprep.subr.mxu0 0.0
      %321 = vmatpush1.msra.mxu0 %v249
      %322 = vmatprep.subr.mxu0 0.0
      %323 = vmatpush1.msra.mxu0 %v250
      %324 = vmatprep.subr.mxu0 0.0
      %325 = vmatpush1.msra.mxu0 %v251
      %326 = vmatprep.subr.mxu0 0.0
      %327 = vmatpush1.msra.mxu0 %v252
      %328 = vmatprep.subr.mxu0 0.0
      %329 = vmatpush1.msra.mxu0 %v253
      %330 = vmatprep.subr.mxu0 0.0
      %331 = vmatpush1.msra.mxu0 %v254
      %332 = vmatprep.subr.mxu0 0.0
      %333 = vmatpush1.msra.mxu0 %v255
      %334 = vmatprep.subr.mxu0 0.0
      %335 = vmatpush1.msra.mxu0 %v256
      %336 = vmatprep.subr.mxu0 0.0
      %337 = vmatpush1.msra.mxu0 %v257
      %338 = vmatprep.subr.mxu0 0.0
      %339 = vmatpush1.msra.mxu0 %v258
      %340 = vmatprep.subr.mxu0 0.0
      %341 = vmatpush1.msra.mxu0 %v259
      %342 = vmatprep.subr.mxu0 0.0
      %343 = vmatpush1.msra.mxu0 %v260
      %344 = vmatprep.subr.mxu0 0.0
      %345 = vmatpush1.msra.mxu0 %v261
      %346 = vmatprep.subr.mxu0 0.0
      %347 = vmatpush1.msra.mxu0 %v262
      %348 = vmatprep.subr.mxu0 0.0
      %349 = vmatpush1.msra.mxu0 %v263
      %350 = vmatprep.subr.mxu0 0.0
      %351 = vmatpush1.msra.mxu0 %v264
      %352 = vmatprep.subr.mxu0 0.0
      %353 = vmatpush1.msra.mxu0 %v265
      %354 = vmatprep.subr.mxu0 0.0
      %355 = vmatpush1.msra.mxu0 %v266
      %356 = vmatprep.subr.mxu0 0.0
      %357 = vmatpush1.msra.mxu0 %v267
      %358 = vmatprep.subr.mxu0 0.0
      %359 = vmatpush1.msra.mxu0 %v268
      %360 = vmatprep.subr.mxu0 0.0
      %361 = vmatpush1.msra.mxu0 %v269
      %362 = vmatprep.subr.mxu0 0.0
      %363 = vmatpush1.msra.mxu0 %v270
      %364 = vmatprep.subr.mxu0 0.0
      %365 = vmatpush1.msra.mxu0 %v271
      %366 = vmatprep.subr.mxu0 0.0
      %367 = vmatpush1.msra.mxu0 %v272
      %368 = vmatprep.subr.mxu0 0.0
      %369 = vmatpush1.msra.mxu0 %v273
      %370 = vmatprep.subr.mxu0 0.0
      %371 = vmatpush1.msra.mxu0 %v274
      %372 = vmatprep.subr.mxu0 0.0
      %373 = vmatpush1.msra.mxu0 %v275
      %374 = vmatprep.subr.mxu0 0.0
      %375 = vmatpush1.msra.mxu0 %v276
      %376 = vmatprep.subr.mxu0 0.0
      %377 = vmatpush1.msra.mxu0 %v277
      %378 = vmatprep.mubr.f32.mxu0 %v279
      %379 = vmatmul.mubr.f32.gmra.mrb[0].mxu0 %v278
      %v380 = vpop.f32.mrb[0].mxu0
      %v381 = vadd.f32 0.0, %v380
      %v382 = vpop.f32.mrb[0].mxu0
      %383 = vmatprep.mubr.f32.mxu0 %v281
      %384 = vmatmul.mubr.f32.gmra.mrb[0].mxu0 %v280
      %v385 = vpop.f32.mrb[0].mxu0
      %v386 = vadd.f32 0.0, %v385
      %v387 = vpop.f32.mrb[0].mxu0
      %388 = vmatprep.mubr.f32.mxu0 %v283
      %389 = vmatmul.mubr.f32.gmra.mrb[0].mxu0 %v282
      %v390 = vpop.f32.mrb[0].mxu0
      %v391 = vadd.f32 0.0, %v390
      %v392 = vpop.f32.mrb[0].mxu0
      %393 = vmatprep.mubr.f32.mxu0 %v285
      %394 = vmatmul.mubr.f32.gmra.mrb[0].mxu0 %v284
      %v395 = vpop.f32.mrb[0].mxu0
      %v396 = vadd.f32 0.0, %v395
      %v397 = vpop.f32.mrb[0].mxu0
      %398 = vmatprep.mubr.f32.mxu0 %v287
      %399 = vmatmul.mubr.f32.gmra.mrb[0].mxu0 %v286
      %v400 = vpop.f32.mrb[0].mxu0
      %v401 = vadd.f32 0.0, %v400
      %v402 = vpop.f32.mrb[0].mxu0
      %403 = vmatprep.mubr.f32.mxu0 %v289
      %404 = vmatmul.mubr.f32.gmra.mrb[0].mxu0 %v288
      %v405 = vpop.f32.mrb[0].mxu0
      %v406 = vadd.f32 0.0, %v405
      %v407 = vpop.f32.mrb[0].mxu0
      %408 = vmatprep.mubr.f32.mxu0 %v291
      %409 = vmatmul.mubr.f32.gmra.mrb[0].mxu0 %v290
      %v410 = vpop.f32.mrb[0].mxu0
      %v411 = vadd.f32 0.0, %v410
      %v412 = vpop.f32.mrb[0].mxu0
      %413 = vmatprep.mubr.f32.mxu0 %v293
      %414 = vmatmul.mubr.f32.gmra.mrb[0].mxu0 %v292
      %v415 = vpop.f32.mrb[0].mxu0
      %v416 = vadd.f32 0.0, %v415
      %v417 = vpop.f32.mrb[0].mxu0
      %418 = vmatprep.mubr.f32.mxu0 %v295
      %419 = vmatmul.mubr.f32.gmra.mrb[0].mxu0 %v294
      %v420 = vpop.f32.mrb[0].mxu0
      %v421 = vadd.f32 0.0, %v420
      %v422 = vpop.f32.mrb[0].mxu0
      %423 = vmatprep.mubr.f32.mxu0 %v297
      %424 = vmatmul.mubr.f32.gmra.mrb[0].mxu0 %v296
      %v425 = vpop.f32.mrb[0].mxu0
      %v426 = vadd.f32 0.0, %v425
      %v427 = vpop.f32.mrb[0].mxu0
      %428 = vmatprep.mubr.f32.mxu0 %v299
      %429 = vmatmul.mubr.f32.gmra.mrb[0].mxu0 %v298
      %v430 = vpop.f32.mrb[0].mxu0
      %v431 = vadd.f32 0.0, %v430
      %v432 = vpop.f32.mrb[0].mxu0
      %433 = vmatprep.mubr.f32.mxu0 %v301
      %434 = vmatmul.mubr.f32.gmra.mrb[0].mxu0 %v300
      %v435 = vpop.f32.mrb[0].mxu0
      %v436 = vadd.f32 0.0, %v435
      %v437 = vpop.f32.mrb[0].mxu0
      %438 = vmatprep.mubr.f32.mxu0 %v303
      %439 = vmatmul.mubr.f32.gmra.mrb[0].mxu0 %v302
      %v440 = vpop.f32.mrb[0].mxu0
      %v441 = vadd.f32 0.0, %v440
      %v442 = vpop.f32.mrb[0].mxu0
      %443 = vmatprep.mubr.f32.mxu0 %v305
      %444 = vmatmul.mubr.f32.gmra.mrb[0].mxu0 %v304
      %v445 = vpop.f32.mrb[0].mxu0
      %v446 = vadd.f32 0.0, %v445
      %v447 = vpop.f32.mrb[0].mxu0
      %448 = vmatprep.mubr.f32.mxu0 %v307
      %449 = vmatmul.mubr.f32.gmra.mrb[0].mxu0 %v306
      %v450 = vpop.f32.mrb[0].mxu0
      %v451 = vadd.f32 0.0, %v450
      %v452 = vpop.f32.mrb[0].mxu0
      %453 = vmatprep.mubr.f32.mxu0 %v309
      %454 = vmatmul.mubr.f32.gmra.mrb[0].mxu0 %v308
      %v455 = vpop.f32.mrb[0].mxu0
      %v456 = vadd.f32 0.0, %v455
      %v457 = vpop.f32.mrb[0].mxu0
      %458 = vmatprep.mubr.f32.mxu0 %v311
      %459 = vmatmul.mubr.f32.gmra.mrb[0].mxu0 %v310
      %v460 = vpop.f32.mrb[0].mxu0
      %v461 = vadd.f32 0.0, %v460
      %v462 = vpop.f32.mrb[0].mxu0
      %463 = vmatprep.mubr.f32.mxu0 %v313
      %464 = vmatmul.mubr.f32.gmra.mrb[0].mxu0 %v312
      %v465 = vpop.f32.mrb[0].mxu0
      %v466 = vadd.f32 0.0, %v465
      %v467 = vpop.f32.mrb[0].mxu0
      %468 = vdwg.mxu0
      %s469 = scalar_lea.vmem %s2, 288
      %v470 = vld [vmem:[%s469] sm:$0xff]
      %v471 = vld [vmem:[%s469 + $0x8] sm:$0xff]
      %v472 = vld [vmem:[%s469 + $0x10] sm:$0xff]
      %v473 = vld [vmem:[%s469 + $0x18] sm:$0xff]
      %v474 = vld [vmem:[%s469 + $0x20] sm:$0xff]
      %v475 = vld [vmem:[%s469 + $0x28] sm:$0xff]
      %v476 = vld [vmem:[%s469 + $0x30] sm:$0xff]
      %v477 = vld [vmem:[%s469 + $0x38] sm:$0xff]
      %v478 = vld [vmem:[%s469 + $0x40] sm:$0xff]
      %v479 = vld [vmem:[%s469 + $0x48] sm:$0xff]
      %v480 = vld [vmem:[%s469 + $0x50] sm:$0xff]
      %v481 = vld [vmem:[%s469 + $0x58] sm:$0xff]
      %v482 = vld [vmem:[%s469 + $0x60] sm:$0xff]
      %v483 = vld [vmem:[%s469 + $0x68] sm:$0xff]
      %v484 = vld [vmem:[%s469 + $0x70] sm:$0xff]
      %v485 = vld [vmem:[%s469 + $0x78] sm:$0xff]
      %v486 = vld [vmem:[%s469 + $0x80] sm:$0xff]
      %v487 = vld [vmem:[%s469 + $0x88] sm:$0xff]
      %v488 = vld [vmem:[%s469 + $0x90] sm:$0xff]
      %v489 = vld [vmem:[%s469 + $0x98] sm:$0xff]
      %v490 = vld [vmem:[%s469 + $0xa0] sm:$0xff]
      %v491 = vld [vmem:[%s469 + $0xa8] sm:$0xff]
      %v492 = vld [vmem:[%s469 + $0xb0] sm:$0xff]
      %v493 = vld [vmem:[%s469 + $0xb8] sm:$0xff]
      %v494 = vld [vmem:[%s469 + $0xc0] sm:$0xff]
      %v495 = vld [vmem:[%s469 + $0xc8] sm:$0xff]
      %v496 = vld [vmem:[%s469 + $0xd0] sm:$0xff]
      %v497 = vld [vmem:[%s469 + $0xd8] sm:$0xff]
      %v498 = vld [vmem:[%s469 + $0xe0] sm:$0xff]
      %v499 = vld [vmem:[%s469 + $0xe8] sm:$0xff]
      %v500 = vld [vmem:[%s469 + $0xf0] sm:$0xff]
      %v501 = vld [vmem:[%s469 + $0xf8] sm:$0xff]
      %v502 = vld [vmem:[%s469 + $0x100] sm:$0xff]
      %v503 = vld [vmem:[%s469 + $0x108] sm:$0xff]
      %v504 = vld [vmem:[%s469 + $0x110] sm:$0xff]
      %v505 = vld [vmem:[%s469 + $0x118] sm:$0xff]
      %506 = vmatprep.subr.mxu0 0.0
      %507 = vmatpush1.msra.mxu0 %v246
      %508 = vmatprep.subr.mxu0 0.0
      %509 = vmatpush1.msra.mxu0 %v247
      %510 = vmatprep.subr.mxu0 0.0
      %511 = vmatpush1.msra.mxu0 %v248
      %512 = vmatprep.subr.mxu0 0.0
      %513 = vmatpush1.msra.mxu0 %v249
      %514 = vmatprep.subr.mxu0 0.0
      %515 = vmatpush1.msra.mxu0 %v250
      %516 = vmatprep.subr.mxu0 0.0
      %517 = vmatpush1.msra.mxu0 %v251
      %518 = vmatprep.subr.mxu0 0.0
      %519 = vmatpush1.msra.mxu0 %v252
      %520 = vmatprep.subr.mxu0 0.0
      %521 = vmatpush1.msra.mxu0 %v253
      %522 = vmatprep.subr.mxu0 0.0
      %523 = vmatpush1.msra.mxu0 %v254
      %524 = vmatprep.subr.mxu0 0.0
      %525 = vmatpush1.msra.mxu0 %v255
      %526 = vmatprep.subr.mxu0 0.0
      %527 = vmatpush1.msra.mxu0 %v256
      %528 = vmatprep.subr.mxu0 0.0
      %529 = vmatpush1.msra.mxu0 %v257
      %530 = vmatprep.subr.mxu0 0.0
      %531 = vmatpush1.msra.mxu0 %v258
      %532 = vmatprep.subr.mxu0 0.0
      %533 = vmatpush1.msra.mxu0 %v259
      %534 = vmatprep.subr.mxu0 0.0
      %535 = vmatpush1.msra.mxu0 %v260
      %536 = vmatprep.subr.mxu0 0.0
      %537 = vmatpush1.msra.mxu0 %v261
      %538 = vmatprep.subr.mxu0 0.0
      %539 = vmatpush1.msra.mxu0 %v262
      %540 = vmatprep.subr.mxu0 0.0
      %541 = vmatpush1.msra.mxu0 %v263
      %542 = vmatprep.subr.mxu0 0.0
      %543 = vmatpush1.msra.mxu0 %v264
      %544 = vmatprep.subr.mxu0 0.0
      %545 = vmatpush1.msra.mxu0 %v265
      %546 = vmatprep.subr.mxu0 0.0
      %547 = vmatpush1.msra.mxu0 %v266
      %548 = vmatprep.subr.mxu0 0.0
      %549 = vmatpush1.msra.mxu0 %v267
      %550 = vmatprep.subr.mxu0 0.0
      %551 = vmatpush1.msra.mxu0 %v268
      %552 = vmatprep.subr.mxu0 0.0
      %553 = vmatpush1.msra.mxu0 %v269
      %554 = vmatprep.subr.mxu0 0.0
      %555 = vmatpush1.msra.mxu0 %v270
      %556 = vmatprep.subr.mxu0 0.0
      %557 = vmatpush1.msra.mxu0 %v271
      %558 = vmatprep.subr.mxu0 0.0
      %559 = vmatpush1.msra.mxu0 %v272
      %560 = vmatprep.subr.mxu0 0.0
      %561 = vmatpush1.msra.mxu0 %v273
      %562 = vmatprep.subr.mxu0 0.0
      %563 = vmatpush1.msra.mxu0 %v274
      %564 = vmatprep.subr.mxu0 0.0
      %565 = vmatpush1.msra.mxu0 %v275
      %566 = vmatprep.subr.mxu0 0.0
      %567 = vmatpush1.msra.mxu0 %v276
      %568 = vmatprep.subr.mxu0 0.0
      %569 = vmatpush1.msra.mxu0 %v277
      %570 = vmatprep.mubr.f32.mxu0 %v471
      %571 = vmatmul.mubr.f32.gmra.mrb[0].mxu0 %v470
      %v572 = vpop.f32.mrb[0].mxu0
      %v573 = vadd.f32 0.0, %v572
      %v574 = vpop.f32.mrb[0].mxu0
      %575 = vmatprep.mubr.f32.mxu0 %v473
      %576 = vmatmul.mubr.f32.gmra.mrb[0].mxu0 %v472
      %v577 = vpop.f32.mrb[0].mxu0
      %v578 = vadd.f32 0.0, %v577
      %v579 = vpop.f32.mrb[0].mxu0
      %580 = vmatprep.mubr.f32.mxu0 %v475
      %581 = vmatmul.mubr.f32.gmra.mrb[0].mxu0 %v474
      %v582 = vpop.f32.mrb[0].mxu0
      %v583 = vadd.f32 0.0, %v582
      %v584 = vpop.f32.mrb[0].mxu0
      %585 = vmatprep.mubr.f32.mxu0 %v477
      %586 = vmatmul.mubr.f32.gmra.mrb[0].mxu0 %v476
      %v587 = vpop.f32.mrb[0].mxu0
      %v588 = vadd.f32 0.0, %v587
      %v589 = vpop.f32.mrb[0].mxu0
      %590 = vmatprep.mubr.f32.mxu0 %v479
      %591 = vmatmul.mubr.f32.gmra.mrb[0].mxu0 %v478
      %v592 = vpop.f32.mrb[0].mxu0
      %v593 = vadd.f32 0.0, %v592
      %v594 = vpop.f32.mrb[0].mxu0
      %595 = vmatprep.mubr.f32.mxu0 %v481
      %596 = vmatmul.mubr.f32.gmra.mrb[0].mxu0 %v480
      %v597 = vpop.f32.mrb[0].mxu0
      %v598 = vadd.f32 0.0, %v597
      %v599 = vpop.f32.mrb[0].mxu0
      %600 = vmatprep.mubr.f32.mxu0 %v483
      %601 = vmatmul.mubr.f32.gmra.mrb[0].mxu0 %v482
      %v602 = vpop.f32.mrb[0].mxu0
      %v603 = vadd.f32 0.0, %v602
      %v604 = vpop.f32.mrb[0].mxu0
      %605 = vmatprep.mubr.f32.mxu0 %v485
      %606 = vmatmul.mubr.f32.gmra.mrb[0].mxu0 %v484
      %v607 = vpop.f32.mrb[0].mxu0
      %v608 = vadd.f32 0.0, %v607
      %v609 = vpop.f32.mrb[0].mxu0
      %610 = vmatprep.mubr.f32.mxu0 %v487
      %611 = vmatmul.mubr.f32.gmra.mrb[0].mxu0 %v486
      %v612 = vpop.f32.mrb[0].mxu0
      %v613 = vadd.f32 0.0, %v612
      %v614 = vpop.f32.mrb[0].mxu0
      %615 = vmatprep.mubr.f32.mxu0 %v489
      %616 = vmatmul.mubr.f32.gmra.mrb[0].mxu0 %v488
      %v617 = vpop.f32.mrb[0].mxu0
      %v618 = vadd.f32 0.0, %v617
      %v619 = vpop.f32.mrb[0].mxu0
      %620 = vmatprep.mubr.f32.mxu0 %v491
      %621 = vmatmul.mubr.f32.gmra.mrb[0].mxu0 %v490
      %v622 = vpop.f32.mrb[0].mxu0
      %v623 = vadd.f32 0.0, %v622
      %v624 = vpop.f32.mrb[0].mxu0
      %625 = vmatprep.mubr.f32.mxu0 %v493
      %626 = vmatmul.mubr.f32.gmra.mrb[0].mxu0 %v492
      %v627 = vpop.f32.mrb[0].mxu0
      %v628 = vadd.f32 0.0, %v627
      %v629 = vpop.f32.mrb[0].mxu0
      %630 = vmatprep.mubr.f32.mxu0 %v495
      %631 = vmatmul.mubr.f32.gmra.mrb[0].mxu0 %v494
      %v632 = vpop.f32.mrb[0].mxu0
      %v633 = vadd.f32 0.0, %v632
      %v634 = vpop.f32.mrb[0].mxu0
      %635 = vmatprep.mubr.f32.mxu0 %v497
      %636 = vmatmul.mubr.f32.gmra.mrb[0].mxu0 %v496
      %v637 = vpop.f32.mrb[0].mxu0
      %v638 = vadd.f32 0.0, %v637
      %v639 = vpop.f32.mrb[0].mxu0
      %640 = vmatprep.mubr.f32.mxu0 %v499
      %641 = vmatmul.mubr.f32.gmra.mrb[0].mxu0 %v498
      %v642 = vpop.f32.mrb[0].mxu0
      %v643 = vadd.f32 0.0, %v642
      %v644 = vpop.f32.mrb[0].mxu0
      %645 = vmatprep.mubr.f32.mxu0 %v501
      %646 = vmatmul.mubr.f32.gmra.mrb[0].mxu0 %v500
      %v647 = vpop.f32.mrb[0].mxu0
      %v648 = vadd.f32 0.0, %v647
      %v649 = vpop.f32.mrb[0].mxu0
      %650 = vmatprep.mubr.f32.mxu0 %v503
      %651 = vmatmul.mubr.f32.gmra.mrb[0].mxu0 %v502
      %v652 = vpop.f32.mrb[0].mxu0
      %v653 = vadd.f32 0.0, %v652
      %v654 = vpop.f32.mrb[0].mxu0
      %655 = vmatprep.mubr.f32.mxu0 %v505
      %656 = vmatmul.mubr.f32.gmra.mrb[0].mxu0 %v504
      %v657 = vpop.f32.mrb[0].mxu0
      %v658 = vadd.f32 0.0, %v657
      %v659 = vpop.f32.mrb[0].mxu0
      %660 = vdwg.mxu0
      %v661 = vld [vmem:[%s237] sm:$0xff]
      %v662 = vld [vmem:[%s237 + $0x8] sm:$0xff]
      %v663 = vld [vmem:[%s237 + $0x10] sm:$0xff]
      %v664 = vld [vmem:[%s237 + $0x18] sm:$0xff]
      %v665 = vld [vmem:[%s237 + $0x20] sm:$0xff]
      %v666 = vld [vmem:[%s237 + $0x28] sm:$0xff]
      %v667 = vld [vmem:[%s237 + $0x30] sm:$0xff]
      %v668 = vld [vmem:[%s237 + $0x38] sm:$0xff]
      %v669 = vld [vmem:[%s237 + $0x40] sm:$0xff]
      %v670 = vld [vmem:[%s237 + $0x48] sm:$0xff]
      %v671 = vld [vmem:[%s237 + $0x50] sm:$0xff]
      %v672 = vld [vmem:[%s237 + $0x58] sm:$0xff]
      %v673 = vld [vmem:[%s237 + $0x60] sm:$0xff]
      %v674 = vld [vmem:[%s237 + $0x68] sm:$0xff]
      %v675 = vld [vmem:[%s237 + $0x70] sm:$0xff]
      %v676 = vld [vmem:[%s237 + $0x78] sm:$0xff]
      %v677 = vld [vmem:[%s237 + $0x80] sm:$0xff]
      %v678 = vld [vmem:[%s237 + $0x88] sm:$0xff]
      %s679 = scalar_lea.vmem %s237, 144
      %v680 = vld [vmem:[%s679] sm:$0xff]
      %v681 = vld [vmem:[%s679 + $0x8] sm:$0xff]
      %v682 = vld [vmem:[%s679 + $0x10] sm:$0xff]
      %v683 = vld [vmem:[%s679 + $0x18] sm:$0xff]
      %v684 = vld [vmem:[%s679 + $0x20] sm:$0xff]
      %v685 = vld [vmem:[%s679 + $0x28] sm:$0xff]
      %v686 = vld [vmem:[%s679 + $0x30] sm:$0xff]
      %v687 = vld [vmem:[%s679 + $0x38] sm:$0xff]
      %v688 = vld [vmem:[%s679 + $0x40] sm:$0xff]
      %v689 = vld [vmem:[%s679 + $0x48] sm:$0xff]
      %v690 = vld [vmem:[%s679 + $0x50] sm:$0xff]
      %v691 = vld [vmem:[%s679 + $0x58] sm:$0xff]
      %v692 = vld [vmem:[%s679 + $0x60] sm:$0xff]
      %v693 = vld [vmem:[%s679 + $0x68] sm:$0xff]
      %v694 = vld [vmem:[%s679 + $0x70] sm:$0xff]
      %v695 = vld [vmem:[%s679 + $0x78] sm:$0xff]
      %v696 = vld [vmem:[%s679 + $0x80] sm:$0xff]
      %v697 = vld [vmem:[%s679 + $0x88] sm:$0xff]
      %v698 = vmul.f32 %v381, %v661
      %v699 = vmul.f32 %v386, %v662
      %v700 = vmul.f32 %v391, %v663
      %v701 = vmul.f32 %v396, %v664
      %v702 = vmul.f32 %v401, %v665
      %v703 = vmul.f32 %v406, %v666
      %v704 = vmul.f32 %v411, %v667
      %v705 = vmul.f32 %v416, %v668
      %v706 = vmul.f32 %v421, %v669
      %v707 = vmul.f32 %v426, %v670
      %v708 = vmul.f32 %v431, %v671
      %v709 = vmul.f32 %v436, %v672
      %v710 = vmul.f32 %v441, %v673
      %v711 = vmul.f32 %v446, %v674
      %v712 = vmul.f32 %v451, %v675
      %v713 = vmul.f32 %v456, %v676
      %v714 = vmul.f32 %v461, %v677
      %v715 = vmul.f32 %v466, %v678
      %v716 = vmul.f32 %v573, %v680
      %v717 = vmul.f32 %v578, %v681
      %v718 = vmul.f32 %v583, %v682
      %v719 = vmul.f32 %v588, %v683
      %v720 = vmul.f32 %v593, %v684
      %v721 = vmul.f32 %v598, %v685
      %v722 = vmul.f32 %v603, %v686
      %v723 = vmul.f32 %v608, %v687
      %v724 = vmul.f32 %v613, %v688
      %v725 = vmul.f32 %v618, %v689
      %v726 = vmul.f32 %v623, %v690
      %v727 = vmul.f32 %v628, %v691
      %v728 = vmul.f32 %v633, %v692
      %v729 = vmul.f32 %v638, %v693
      %v730 = vmul.f32 %v643, %v694
      %v731 = vmul.f32 %v648, %v695
      %v732 = vmul.f32 %v653, %v696
      %v733 = vmul.f32 %v658, %v697
      %v734 = vsub.f32 %v698, %v716
      %v735 = vsub.f32 %v699, %v717
      %v736 = vsub.f32 %v700, %v718
      %v737 = vsub.f32 %v701, %v719
      %v738 = vsub.f32 %v702, %v720
      %v739 = vsub.f32 %v703, %v721
      %v740 = vsub.f32 %v704, %v722
      %v741 = vsub.f32 %v705, %v723
      %v742 = vsub.f32 %v706, %v724
      %v743 = vsub.f32 %v707, %v725
      %v744 = vsub.f32 %v708, %v726
      %v745 = vsub.f32 %v709, %v727
      %v746 = vsub.f32 %v710, %v728
      %v747 = vsub.f32 %v711, %v729
      %v748 = vsub.f32 %v712, %v730
      %v749 = vsub.f32 %v713, %v731
      %v750 = vsub.f32 %v714, %v732
      %v751 = vsub.f32 %v715, %v733
      %v752 = vmul.f32 %v381, %v680
      %v753 = vmul.f32 %v386, %v681
      %v754 = vmul.f32 %v391, %v682
      %v755 = vmul.f32 %v396, %v683
      %v756 = vmul.f32 %v401, %v684
      %v757 = vmul.f32 %v406, %v685
      %v758 = vmul.f32 %v411, %v686
      %v759 = vmul.f32 %v416, %v687
      %v760 = vmul.f32 %v421, %v688
      %v761 = vmul.f32 %v426, %v689
      %v762 = vmul.f32 %v431, %v690
      %v763 = vmul.f32 %v436, %v691
      %v764 = vmul.f32 %v441, %v692
      %v765 = vmul.f32 %v446, %v693
      %v766 = vmul.f32 %v451, %v694
      %v767 = vmul.f32 %v456, %v695
      %v768 = vmul.f32 %v461, %v696
      %v769 = vmul.f32 %v466, %v697
      %v770 = vmul.f32 %v573, %v661
      %v771 = vmul.f32 %v578, %v662
      %v772 = vmul.f32 %v583, %v663
      %v773 = vmul.f32 %v588, %v664
      %v774 = vmul.f32 %v593, %v665
      %v775 = vmul.f32 %v598, %v666
      %v776 = vmul.f32 %v603, %v667
      %v777 = vmul.f32 %v608, %v668
      %v778 = vmul.f32 %v613, %v669
      %v779 = vmul.f32 %v618, %v670
      %v780 = vmul.f32 %v623, %v671
      %v781 = vmul.f32 %v628, %v672
      %v782 = vmul.f32 %v633, %v673
      %v783 = vmul.f32 %v638, %v674
      %v784 = vmul.f32 %v643, %v675
      %v785 = vmul.f32 %v648, %v676
      %v786 = vmul.f32 %v653, %v677
      %v787 = vmul.f32 %v658, %v678
      %v788 = vadd.f32 %v752, %v770
      %v789 = vadd.f32 %v753, %v771
      %v790 = vadd.f32 %v754, %v772
      %v791 = vadd.f32 %v755, %v773
      %v792 = vadd.f32 %v756, %v774
      %v793 = vadd.f32 %v757, %v775
      %v794 = vadd.f32 %v758, %v776
      %v795 = vadd.f32 %v759, %v777
      %v796 = vadd.f32 %v760, %v778
      %v797 = vadd.f32 %v761, %v779
      %v798 = vadd.f32 %v762, %v780
      %v799 = vadd.f32 %v763, %v781
      %v800 = vadd.f32 %v764, %v782
      %v801 = vadd.f32 %v765, %v783
      %v802 = vadd.f32 %v766, %v784
      %v803 = vadd.f32 %v767, %v785
      %v804 = vadd.f32 %v768, %v786
      %v805 = vadd.f32 %v769, %v787
      %v806 = vld [vmem:[%s3] sm:$0xff]
      %v807 = vld [vmem:[%s3 + $0x8] sm:$0xff]
      %v808 = vld [vmem:[%s3 + $0x10] sm:$0xff]
      %v809 = vld [vmem:[%s3 + $0x18] sm:$0xff]
      %v810 = vld [vmem:[%s3 + $0x20] sm:$0xff]
      %v811 = vld [vmem:[%s3 + $0x28] sm:$0xff]
      %v812 = vld [vmem:[%s3 + $0x30] sm:$0xff]
      %v813 = vld [vmem:[%s3 + $0x38] sm:$0xff]
      %v814 = vld [vmem:[%s3 + $0x40] sm:$0xff]
      %v815 = vld [vmem:[%s3 + $0x48] sm:$0xff]
      %v816 = vld [vmem:[%s3 + $0x50] sm:$0xff]
      %v817 = vld [vmem:[%s3 + $0x58] sm:$0xff]
      %v818 = vld [vmem:[%s3 + $0x60] sm:$0xff]
      %v819 = vld [vmem:[%s3 + $0x68] sm:$0xff]
      %v820 = vld [vmem:[%s3 + $0x70] sm:$0xff]
      %v821 = vld [vmem:[%s3 + $0x78] sm:$0xff]
      %v822 = vld [vmem:[%s3 + $0x80] sm:$0xff]
      %v823 = vld [vmem:[%s3 + $0x88] sm:$0xff]
      %v824 = vld [vmem:[%s3 + $0x90] sm:$0xff]
      %v825 = vld [vmem:[%s3 + $0x98] sm:$0xff]
      %v826 = vld [vmem:[%s3 + $0xa0] sm:$0xff]
      %v827 = vld [vmem:[%s3 + $0xa8] sm:$0xff]
      %v828 = vld [vmem:[%s3 + $0xb0] sm:$0xff]
      %v829 = vld [vmem:[%s3 + $0xb8] sm:$0xff]
      %v830 = vld [vmem:[%s3 + $0xc0] sm:$0xff]
      %v831 = vld [vmem:[%s3 + $0xc8] sm:$0xff]
      %v832 = vld [vmem:[%s3 + $0xd0] sm:$0xff]
      %v833 = vld [vmem:[%s3 + $0xd8] sm:$0xff]
      %v834 = vld [vmem:[%s3 + $0xe0] sm:$0xff]
      %v835 = vld [vmem:[%s3 + $0xe8] sm:$0xff]
      %v836 = vld [vmem:[%s3 + $0xf0] sm:$0xff]
      %v837 = vld [vmem:[%s3 + $0xf8] sm:$0xff]
      %v838 = vld [vmem:[%s3 + $0x100] sm:$0xff]
      %v839 = vld [vmem:[%s3 + $0x108] sm:$0xff]
      %v840 = vld [vmem:[%s3 + $0x110] sm:$0xff]
      %v841 = vld [vmem:[%s3 + $0x118] sm:$0xff]
      %v842 = vld [vmem:[%s3 + $0x120] sm:$0xff]
      %v843 = vld [vmem:[%s3 + $0x128] sm:$0xff]
      %v844 = vld [vmem:[%s3 + $0x130] sm:$0xff]
      %v845 = vld [vmem:[%s3 + $0x138] sm:$0xff]
      %v846 = vld [vmem:[%s3 + $0x140] sm:$0xff]
      %v847 = vld [vmem:[%s3 + $0x148] sm:$0xff]
      %v848 = vld [vmem:[%s3 + $0x150] sm:$0xff]
      %v849 = vld [vmem:[%s3 + $0x158] sm:$0xff]
      %v850 = vld [vmem:[%s3 + $0x160] sm:$0xff]
      %v851 = vld [vmem:[%s3 + $0x168] sm:$0xff]
      %v852 = vld [vmem:[%s3 + $0x170] sm:$0xff]
      %v853 = vld [vmem:[%s3 + $0x178] sm:$0xff]
      %v854 = vld [vmem:[%s3 + $0x180] sm:$0xff]
      %v855 = vld [vmem:[%s3 + $0x188] sm:$0xff]
      %v856 = vld [vmem:[%s3 + $0x190] sm:$0xff]
      %v857 = vld [vmem:[%s3 + $0x198] sm:$0xff]
      %v858 = vld [vmem:[%s3 + $0x1a0] sm:$0xff]
      %v859 = vld [vmem:[%s3 + $0x1a8] sm:$0xff]
      %v860 = vld [vmem:[%s3 + $0x1b0] sm:$0xff]
      %v861 = vld [vmem:[%s3 + $0x1b8] sm:$0xff]
      %v862 = vld [vmem:[%s3 + $0x1c0] sm:$0xff]
      %v863 = vld [vmem:[%s3 + $0x1c8] sm:$0xff]
      %v864 = vld [vmem:[%s3 + $0x1d0] sm:$0xff]
      %v865 = vld [vmem:[%s3 + $0x1d8] sm:$0xff]
      %v866 = vld [vmem:[%s3 + $0x1e0] sm:$0xff]
      %v867 = vld [vmem:[%s3 + $0x1e8] sm:$0xff]
      %v868 = vld [vmem:[%s3 + $0x1f0] sm:$0xff]
      %v869 = vld [vmem:[%s3 + $0x1f8] sm:$0xff]
      %s870 = scalar_lea.vmem %s3, 512
      %v871 = vld [vmem:[%s870] sm:$0xff]
      %v872 = vld [vmem:[%s870 + $0x8] sm:$0xff]
      %v873 = vld [vmem:[%s870 + $0x10] sm:$0xff]
      %v874 = vld [vmem:[%s870 + $0x18] sm:$0xff]
      %v875 = vld [vmem:[%s870 + $0x20] sm:$0xff]
      %v876 = vld [vmem:[%s870 + $0x28] sm:$0xff]
      %v877 = vld [vmem:[%s870 + $0x30] sm:$0xff]
      %v878 = vld [vmem:[%s870 + $0x38] sm:$0xff]
      %v879 = vld [vmem:[%s870 + $0x40] sm:$0xff]
      %v880 = vld [vmem:[%s870 + $0x48] sm:$0xff]
      %v881 = vld [vmem:[%s870 + $0x50] sm:$0xff]
      %v882 = vld [vmem:[%s870 + $0x58] sm:$0xff]
      %v883 = vld [vmem:[%s870 + $0x60] sm:$0xff]
      %v884 = vld [vmem:[%s870 + $0x68] sm:$0xff]
      %v885 = vld [vmem:[%s870 + $0x70] sm:$0xff]
      %v886 = vld [vmem:[%s870 + $0x78] sm:$0xff]
      %v887 = vld [vmem:[%s870 + $0x80] sm:$0xff]
      %v888 = vld [vmem:[%s870 + $0x88] sm:$0xff]
      %v889 = vld [vmem:[%s870 + $0x90] sm:$0xff]
      %v890 = vld [vmem:[%s870 + $0x98] sm:$0xff]
      %v891 = vld [vmem:[%s870 + $0xa0] sm:$0xff]
      %v892 = vld [vmem:[%s870 + $0xa8] sm:$0xff]
      %v893 = vld [vmem:[%s870 + $0xb0] sm:$0xff]
      %v894 = vld [vmem:[%s870 + $0xb8] sm:$0xff]
      %v895 = vld [vmem:[%s870 + $0xc0] sm:$0xff]
      %v896 = vld [vmem:[%s870 + $0xc8] sm:$0xff]
      %v897 = vld [vmem:[%s870 + $0xd0] sm:$0xff]
      %v898 = vld [vmem:[%s870 + $0xd8] sm:$0xff]
      %v899 = vld [vmem:[%s870 + $0xe0] sm:$0xff]
      %v900 = vld [vmem:[%s870 + $0xe8] sm:$0xff]
      %v901 = vld [vmem:[%s870 + $0xf0] sm:$0xff]
      %v902 = vld [vmem:[%s870 + $0xf8] sm:$0xff]
      %v903 = vld [vmem:[%s870 + $0x100] sm:$0xff]
      %v904 = vld [vmem:[%s870 + $0x108] sm:$0xff]
      %v905 = vld [vmem:[%s870 + $0x110] sm:$0xff]
      %v906 = vld [vmem:[%s870 + $0x118] sm:$0xff]
      %v907 = vld [vmem:[%s870 + $0x120] sm:$0xff]
      %v908 = vld [vmem:[%s870 + $0x128] sm:$0xff]
      %v909 = vld [vmem:[%s870 + $0x130] sm:$0xff]
      %v910 = vld [vmem:[%s870 + $0x138] sm:$0xff]
      %v911 = vld [vmem:[%s870 + $0x140] sm:$0xff]
      %v912 = vld [vmem:[%s870 + $0x148] sm:$0xff]
      %v913 = vld [vmem:[%s870 + $0x150] sm:$0xff]
      %v914 = vld [vmem:[%s870 + $0x158] sm:$0xff]
      %v915 = vld [vmem:[%s870 + $0x160] sm:$0xff]
      %v916 = vld [vmem:[%s870 + $0x168] sm:$0xff]
      %v917 = vld [vmem:[%s870 + $0x170] sm:$0xff]
      %v918 = vld [vmem:[%s870 + $0x178] sm:$0xff]
      %v919 = vld [vmem:[%s870 + $0x180] sm:$0xff]
      %v920 = vld [vmem:[%s870 + $0x188] sm:$0xff]
      %v921 = vld [vmem:[%s870 + $0x190] sm:$0xff]
      %v922 = vld [vmem:[%s870 + $0x198] sm:$0xff]
      %v923 = vld [vmem:[%s870 + $0x1a0] sm:$0xff]
      %v924 = vld [vmem:[%s870 + $0x1a8] sm:$0xff]
      %v925 = vld [vmem:[%s870 + $0x1b0] sm:$0xff]
      %v926 = vld [vmem:[%s870 + $0x1b8] sm:$0xff]
      %v927 = vld [vmem:[%s870 + $0x1c0] sm:$0xff]
      %v928 = vld [vmem:[%s870 + $0x1c8] sm:$0xff]
      %v929 = vld [vmem:[%s870 + $0x1d0] sm:$0xff]
      %v930 = vld [vmem:[%s870 + $0x1d8] sm:$0xff]
      %v931 = vld [vmem:[%s870 + $0x1e0] sm:$0xff]
      %v932 = vld [vmem:[%s870 + $0x1e8] sm:$0xff]
      %v933 = vld [vmem:[%s870 + $0x1f0] sm:$0xff]
      %v934 = vld [vmem:[%s870 + $0x1f8] sm:$0xff]
      %vm935 = vcmask 130048
      %v937 = vsel %vm935, %v872, 0
      %v940 = vsel %vm935, %v874, 0
      %v943 = vsel %vm935, %v876, 0
      %v946 = vsel %vm935, %v878, 0
      %v949 = vsel %vm935, %v880, 0
      %v952 = vsel %vm935, %v882, 0
      %v955 = vsel %vm935, %v884, 0
      %v958 = vsel %vm935, %v886, 0
      %v961 = vsel %vm935, %v888, 0
      %v964 = vsel %vm935, %v890, 0
      %v967 = vsel %vm935, %v892, 0
      %v970 = vsel %vm935, %v894, 0
      %v973 = vsel %vm935, %v896, 0
      %v976 = vsel %vm935, %v898, 0
      %v979 = vsel %vm935, %v900, 0
      %v982 = vsel %vm935, %v902, 0
      %v985 = vsel %vm935, %v904, 0
      %v988 = vsel %vm935, %v906, 0
      %v991 = vsel %vm935, %v908, 0
      %v994 = vsel %vm935, %v910, 0
      %v997 = vsel %vm935, %v912, 0
      %v1000 = vsel %vm935, %v914, 0
      %v1003 = vsel %vm935, %v916, 0
      %v1006 = vsel %vm935, %v918, 0
      %v1009 = vsel %vm935, %v920, 0
      %v1012 = vsel %vm935, %v922, 0
      %v1015 = vsel %vm935, %v924, 0
      %v1018 = vsel %vm935, %v926, 0
      %v1021 = vsel %vm935, %v928, 0
      %v1024 = vsel %vm935, %v930, 0
      %v1027 = vsel %vm935, %v932, 0
      %v1030 = vsel %vm935, %v934, 0
      %1032 = vmatprep.subr.mxu0 0.0
      %1033 = vmatpush1.msra.mxu0 %v788
      %1034 = vmatprep.subr.mxu0 0.0
      %1035 = vmatpush1.msra.mxu0 %v789
      %1036 = vmatprep.subr.mxu0 0.0
      %1037 = vmatpush1.msra.mxu0 %v790
      %1038 = vmatprep.subr.mxu0 0.0
      %1039 = vmatpush1.msra.mxu0 %v791
      %1040 = vmatprep.subr.mxu0 0.0
      %1041 = vmatpush1.msra.mxu0 %v792
      %1042 = vmatprep.subr.mxu0 0.0
      %1043 = vmatpush1.msra.mxu0 %v793
      %1044 = vmatprep.subr.mxu0 0.0
      %1045 = vmatpush1.msra.mxu0 %v794
      %1046 = vmatprep.subr.mxu0 0.0
      %1047 = vmatpush1.msra.mxu0 %v795
      %1048 = vmatprep.subr.mxu0 0.0
      %1049 = vmatpush1.msra.mxu0 %v796
      %1050 = vmatprep.subr.mxu0 0.0
      %1051 = vmatpush1.msra.mxu0 %v797
      %1052 = vmatprep.subr.mxu0 0.0
      %1053 = vmatpush1.msra.mxu0 %v798
      %1054 = vmatprep.subr.mxu0 0.0
      %1055 = vmatpush1.msra.mxu0 %v799
      %1056 = vmatprep.subr.mxu0 0.0
      %1057 = vmatpush1.msra.mxu0 %v800
      %1058 = vmatprep.subr.mxu0 0.0
      %1059 = vmatpush1.msra.mxu0 %v801
      %1060 = vmatprep.subr.mxu0 0.0
      %1061 = vmatpush1.msra.mxu0 %v802
      %1062 = vmatprep.subr.mxu0 0.0
      %1063 = vmatpush1.msra.mxu0 %v803
      %1064 = vmatprep.subr.mxu0 0.0
      %1065 = vmatpush1.msra.mxu0 %v804
      %1066 = vmatprep.subr.mxu0 0.0
      %1067 = vmatpush1.msra.mxu0 %v805
      %1068 = vmatprep.subr.mxu0 0.0
      %1069 = vmatpush1.msra.mxu0 0.0
      %1070 = vmatprep.subr.mxu0 0.0
      %1071 = vmatpush1.msra.mxu0 0.0
      %1072 = vmatprep.subr.mxu0 0.0
      %1073 = vmatpush1.msra.mxu0 0.0
      %1074 = vmatprep.subr.mxu0 0.0
      %1075 = vmatpush1.msra.mxu0 0.0
      %1076 = vmatprep.subr.mxu0 0.0
      %1077 = vmatpush1.msra.mxu0 0.0
      %1078 = vmatprep.subr.mxu0 0.0
      %1079 = vmatpush1.msra.mxu0 0.0
      %1080 = vmatprep.subr.mxu0 0.0
      %1081 = vmatpush1.msra.mxu0 0.0
      %1082 = vmatprep.subr.mxu0 0.0
      %1083 = vmatpush1.msra.mxu0 0.0
      %1084 = vmatprep.subr.mxu0 0.0
      %1085 = vmatpush1.msra.mxu0 0.0
      %1086 = vmatprep.subr.mxu0 0.0
      %1087 = vmatpush1.msra.mxu0 0.0
      %1088 = vmatprep.subr.mxu0 0.0
      %1089 = vmatpush1.msra.mxu0 0.0
      %1090 = vmatprep.subr.mxu0 0.0
      %1091 = vmatpush1.msra.mxu0 0.0
      %1092 = vmatprep.subr.mxu0 0.0
      %1093 = vmatpush1.msra.mxu0 0.0
      %1094 = vmatprep.subr.mxu0 0.0
      %1095 = vmatpush1.msra.mxu0 0.0
      %1096 = vmatprep.mubr.f32.mxu0 %v937
      %1097 = vmatmul.mubr.f32.gmra.mrb[0].mxu0 %v871
      %v1098 = vpop.f32.mrb[0].mxu0
      %v1099 = vadd.f32 0.0, %v1098
      %v1100 = vpop.f32.mrb[0].mxu0
      %1101 = vmatprep.mubr.f32.mxu0 %v940
      %1102 = vmatmul.mubr.f32.gmra.mrb[0].mxu0 %v873
      %v1103 = vpop.f32.mrb[0].mxu0
      %v1104 = vadd.f32 0.0, %v1103
      %v1105 = vpop.f32.mrb[0].mxu0
      %1106 = vmatprep.mubr.f32.mxu0 %v943
      %1107 = vmatmul.mubr.f32.gmra.mrb[0].mxu0 %v875
      %v1108 = vpop.f32.mrb[0].mxu0
      %v1109 = vadd.f32 0.0, %v1108
      %v1110 = vpop.f32.mrb[0].mxu0
      %1111 = vmatprep.mubr.f32.mxu0 %v946
      %1112 = vmatmul.mubr.f32.gmra.mrb[0].mxu0 %v877
      %v1113 = vpop.f32.mrb[0].mxu0
      %v1114 = vadd.f32 0.0, %v1113
      %v1115 = vpop.f32.mrb[0].mxu0
      %1116 = vmatprep.mubr.f32.mxu0 %v949
      %1117 = vmatmul.mubr.f32.gmra.mrb[0].mxu0 %v879
      %v1118 = vpop.f32.mrb[0].mxu0
      %v1119 = vadd.f32 0.0, %v1118
      %v1120 = vpop.f32.mrb[0].mxu0
      %1121 = vmatprep.mubr.f32.mxu0 %v952
      %1122 = vmatmul.mubr.f32.gmra.mrb[0].mxu0 %v881
      %v1123 = vpop.f32.mrb[0].mxu0
      %v1124 = vadd.f32 0.0, %v1123
      %v1125 = vpop.f32.mrb[0].mxu0
      %1126 = vmatprep.mubr.f32.mxu0 %v955
      %1127 = vmatmul.mubr.f32.gmra.mrb[0].mxu0 %v883
      %v1128 = vpop.f32.mrb[0].mxu0
      %v1129 = vadd.f32 0.0, %v1128
      %v1130 = vpop.f32.mrb[0].mxu0
      %1131 = vmatprep.mubr.f32.mxu0 %v958
      %1132 = vmatmul.mubr.f32.gmra.mrb[0].mxu0 %v885
      %v1133 = vpop.f32.mrb[0].mxu0
      %v1134 = vadd.f32 0.0, %v1133
      %v1135 = vpop.f32.mrb[0].mxu0
      %1136 = vmatprep.mubr.f32.mxu0 %v961
      %1137 = vmatmul.mubr.f32.gmra.mrb[0].mxu0 %v887
      %v1138 = vpop.f32.mrb[0].mxu0
      %v1139 = vadd.f32 0.0, %v1138
      %v1140 = vpop.f32.mrb[0].mxu0
      %1141 = vmatprep.mubr.f32.mxu0 %v964
      %1142 = vmatmul.mubr.f32.gmra.mrb[0].mxu0 %v889
      %v1143 = vpop.f32.mrb[0].mxu0
      %v1144 = vadd.f32 0.0, %v1143
      %v1145 = vpop.f32.mrb[0].mxu0
      %1146 = vmatprep.mubr.f32.mxu0 %v967
      %1147 = vmatmul.mubr.f32.gmra.mrb[0].mxu0 %v891
      %v1148 = vpop.f32.mrb[0].mxu0
      %v1149 = vadd.f32 0.0, %v1148
      %v1150 = vpop.f32.mrb[0].mxu0
      %1151 = vmatprep.mubr.f32.mxu0 %v970
      %1152 = vmatmul.mubr.f32.gmra.mrb[0].mxu0 %v893
      %v1153 = vpop.f32.mrb[0].mxu0
      %v1154 = vadd.f32 0.0, %v1153
      %v1155 = vpop.f32.mrb[0].mxu0
      %1156 = vmatprep.mubr.f32.mxu0 %v973
      %1157 = vmatmul.mubr.f32.gmra.mrb[0].mxu0 %v895
      %v1158 = vpop.f32.mrb[0].mxu0
      %v1159 = vadd.f32 0.0, %v1158
      %v1160 = vpop.f32.mrb[0].mxu0
      %1161 = vmatprep.mubr.f32.mxu0 %v976
      %1162 = vmatmul.mubr.f32.gmra.mrb[0].mxu0 %v897
      %v1163 = vpop.f32.mrb[0].mxu0
      %v1164 = vadd.f32 0.0, %v1163
      %v1165 = vpop.f32.mrb[0].mxu0
      %1166 = vmatprep.mubr.f32.mxu0 %v979
      %1167 = vmatmul.mubr.f32.gmra.mrb[0].mxu0 %v899
      %v1168 = vpop.f32.mrb[0].mxu0
      %v1169 = vadd.f32 0.0, %v1168
      %v1170 = vpop.f32.mrb[0].mxu0
      %1171 = vmatprep.mubr.f32.mxu0 %v982
      %1172 = vmatmul.mubr.f32.gmra.mrb[0].mxu0 %v901
      %v1173 = vpop.f32.mrb[0].mxu0
      %v1174 = vadd.f32 0.0, %v1173
      %v1175 = vpop.f32.mrb[0].mxu0
      %1176 = vmatprep.mubr.f32.mxu0 %v985
      %1177 = vmatmul.mubr.f32.gmra.mrb[0].mxu0 %v903
      %v1178 = vpop.f32.mrb[0].mxu0
      %v1179 = vadd.f32 0.0, %v1178
      %v1180 = vpop.f32.mrb[0].mxu0
      %1181 = vmatprep.mubr.f32.mxu0 %v988
      %1182 = vmatmul.mubr.f32.gmra.mrb[0].mxu0 %v905
      %v1183 = vpop.f32.mrb[0].mxu0
      %v1184 = vadd.f32 0.0, %v1183
      %v1185 = vpop.f32.mrb[0].mxu0
      %1186 = vmatprep.mubr.f32.mxu0 %v991
      %1187 = vmatmul.mubr.f32.gmra.mrb[0].mxu0 %v907
      %v1188 = vpop.f32.mrb[0].mxu0
      %v1189 = vadd.f32 0.0, %v1188
      %v1190 = vpop.f32.mrb[0].mxu0
      %1191 = vmatprep.mubr.f32.mxu0 %v994
      %1192 = vmatmul.mubr.f32.gmra.mrb[0].mxu0 %v909
      %v1193 = vpop.f32.mrb[0].mxu0
      %v1194 = vadd.f32 0.0, %v1193
      %v1195 = vpop.f32.mrb[0].mxu0
      %1196 = vmatprep.mubr.f32.mxu0 %v997
      %1197 = vmatmul.mubr.f32.gmra.mrb[0].mxu0 %v911
      %v1198 = vpop.f32.mrb[0].mxu0
      %v1199 = vadd.f32 0.0, %v1198
      %v1200 = vpop.f32.mrb[0].mxu0
      %1201 = vmatprep.mubr.f32.mxu0 %v1000
      %1202 = vmatmul.mubr.f32.gmra.mrb[0].mxu0 %v913
      %v1203 = vpop.f32.mrb[0].mxu0
      %v1204 = vadd.f32 0.0, %v1203
      %v1205 = vpop.f32.mrb[0].mxu0
      %1206 = vmatprep.mubr.f32.mxu0 %v1003
      %1207 = vmatmul.mubr.f32.gmra.mrb[0].mxu0 %v915
      %v1208 = vpop.f32.mrb[0].mxu0
      %v1209 = vadd.f32 0.0, %v1208
      %v1210 = vpop.f32.mrb[0].mxu0
      %1211 = vmatprep.mubr.f32.mxu0 %v1006
      %1212 = vmatmul.mubr.f32.gmra.mrb[0].mxu0 %v917
      %v1213 = vpop.f32.mrb[0].mxu0
      %v1214 = vadd.f32 0.0, %v1213
      %v1215 = vpop.f32.mrb[0].mxu0
      %1216 = vmatprep.mubr.f32.mxu0 %v1009
      %1217 = vmatmul.mubr.f32.gmra.mrb[0].mxu0 %v919
      %v1218 = vpop.f32.mrb[0].mxu0
      %v1219 = vadd.f32 0.0, %v1218
      %v1220 = vpop.f32.mrb[0].mxu0
      %1221 = vmatprep.mubr.f32.mxu0 %v1012
      %1222 = vmatmul.mubr.f32.gmra.mrb[0].mxu0 %v921
      %v1223 = vpop.f32.mrb[0].mxu0
      %v1224 = vadd.f32 0.0, %v1223
      %v1225 = vpop.f32.mrb[0].mxu0
      %1226 = vmatprep.mubr.f32.mxu0 %v1015
      %1227 = vmatmul.mubr.f32.gmra.mrb[0].mxu0 %v923
      %v1228 = vpop.f32.mrb[0].mxu0
      %v1229 = vadd.f32 0.0, %v1228
      %v1230 = vpop.f32.mrb[0].mxu0
      %1231 = vmatprep.mubr.f32.mxu0 %v1018
      %1232 = vmatmul.mubr.f32.gmra.mrb[0].mxu0 %v925
      %v1233 = vpop.f32.mrb[0].mxu0
      %v1234 = vadd.f32 0.0, %v1233
      %v1235 = vpop.f32.mrb[0].mxu0
      %1236 = vmatprep.mubr.f32.mxu0 %v1021
      %1237 = vmatmul.mubr.f32.gmra.mrb[0].mxu0 %v927
      %v1238 = vpop.f32.mrb[0].mxu0
      %v1239 = vadd.f32 0.0, %v1238
      %v1240 = vpop.f32.mrb[0].mxu0
      %1241 = vmatprep.mubr.f32.mxu0 %v1024
      %1242 = vmatmul.mubr.f32.gmra.mrb[0].mxu0 %v929
      %v1243 = vpop.f32.mrb[0].mxu0
      %v1244 = vadd.f32 0.0, %v1243
      %v1245 = vpop.f32.mrb[0].mxu0
      %1246 = vmatprep.mubr.f32.mxu0 %v1027
      %1247 = vmatmul.mubr.f32.gmra.mrb[0].mxu0 %v931
      %v1248 = vpop.f32.mrb[0].mxu0
      %v1249 = vadd.f32 0.0, %v1248
      %v1250 = vpop.f32.mrb[0].mxu0
      %1251 = vmatprep.mubr.f32.mxu0 %v1030
      %1252 = vmatmul.mubr.f32.gmra.mrb[0].mxu0 %v933
      %v1253 = vpop.f32.mrb[0].mxu0
      %v1254 = vadd.f32 0.0, %v1253
      %v1255 = vpop.f32.mrb[0].mxu0
      %1256 = vdwg.mxu0
      %v1258 = vsel %vm935, %v807, 0
      %v1261 = vsel %vm935, %v809, 0
      %v1264 = vsel %vm935, %v811, 0
      %v1267 = vsel %vm935, %v813, 0
      %v1270 = vsel %vm935, %v815, 0
      %v1273 = vsel %vm935, %v817, 0
      %v1276 = vsel %vm935, %v819, 0
      %v1279 = vsel %vm935, %v821, 0
      %v1282 = vsel %vm935, %v823, 0
      %v1285 = vsel %vm935, %v825, 0
      %v1288 = vsel %vm935, %v827, 0
      %v1291 = vsel %vm935, %v829, 0
      %v1294 = vsel %vm935, %v831, 0
      %v1297 = vsel %vm935, %v833, 0
      %v1300 = vsel %vm935, %v835, 0
      %v1303 = vsel %vm935, %v837, 0
      %v1306 = vsel %vm935, %v839, 0
      %v1309 = vsel %vm935, %v841, 0
      %v1312 = vsel %vm935, %v843, 0
      %v1315 = vsel %vm935, %v845, 0
      %v1318 = vsel %vm935, %v847, 0
      %v1321 = vsel %vm935, %v849, 0
      %v1324 = vsel %vm935, %v851, 0
      %v1327 = vsel %vm935, %v853, 0
      %v1330 = vsel %vm935, %v855, 0
      %v1333 = vsel %vm935, %v857, 0
      %v1336 = vsel %vm935, %v859, 0
      %v1339 = vsel %vm935, %v861, 0
      %v1342 = vsel %vm935, %v863, 0
      %v1345 = vsel %vm935, %v865, 0
      %v1348 = vsel %vm935, %v867, 0
      %v1351 = vsel %vm935, %v869, 0
      %1353 = vmatprep.subr.mxu0 0.0
      %1354 = vmatpush1.msra.mxu0 %v734
      %1355 = vmatprep.subr.mxu0 0.0
      %1356 = vmatpush1.msra.mxu0 %v735
      %1357 = vmatprep.subr.mxu0 0.0
      %1358 = vmatpush1.msra.mxu0 %v736
      %1359 = vmatprep.subr.mxu0 0.0
      %1360 = vmatpush1.msra.mxu0 %v737
      %1361 = vmatprep.subr.mxu0 0.0
      %1362 = vmatpush1.msra.mxu0 %v738
      %1363 = vmatprep.subr.mxu0 0.0
      %1364 = vmatpush1.msra.mxu0 %v739
      %1365 = vmatprep.subr.mxu0 0.0
      %1366 = vmatpush1.msra.mxu0 %v740
      %1367 = vmatprep.subr.mxu0 0.0
      %1368 = vmatpush1.msra.mxu0 %v741
      %1369 = vmatprep.subr.mxu0 0.0
      %1370 = vmatpush1.msra.mxu0 %v742
      %1371 = vmatprep.subr.mxu0 0.0
      %1372 = vmatpush1.msra.mxu0 %v743
      %1373 = vmatprep.subr.mxu0 0.0
      %1374 = vmatpush1.msra.mxu0 %v744
      %1375 = vmatprep.subr.mxu0 0.0
      %1376 = vmatpush1.msra.mxu0 %v745
      %1377 = vmatprep.subr.mxu0 0.0
      %1378 = vmatpush1.msra.mxu0 %v746
      %1379 = vmatprep.subr.mxu0 0.0
      %1380 = vmatpush1.msra.mxu0 %v747
      %1381 = vmatprep.subr.mxu0 0.0
      %1382 = vmatpush1.msra.mxu0 %v748
      %1383 = vmatprep.subr.mxu0 0.0
      %1384 = vmatpush1.msra.mxu0 %v749
      %1385 = vmatprep.subr.mxu0 0.0
      %1386 = vmatpush1.msra.mxu0 %v750
      %1387 = vmatprep.subr.mxu0 0.0
      %1388 = vmatpush1.msra.mxu0 %v751
      %1389 = vmatprep.subr.mxu0 0.0
      %1390 = vmatpush1.msra.mxu0 0.0
      %1391 = vmatprep.subr.mxu0 0.0
      %1392 = vmatpush1.msra.mxu0 0.0
      %1393 = vmatprep.subr.mxu0 0.0
      %1394 = vmatpush1.msra.mxu0 0.0
      %1395 = vmatprep.subr.mxu0 0.0
      %1396 = vmatpush1.msra.mxu0 0.0
      %1397 = vmatprep.subr.mxu0 0.0
      %1398 = vmatpush1.msra.mxu0 0.0
      %1399 = vmatprep.subr.mxu0 0.0
      %1400 = vmatpush1.msra.mxu0 0.0
      %1401 = vmatprep.subr.mxu0 0.0
      %1402 = vmatpush1.msra.mxu0 0.0
      %1403 = vmatprep.subr.mxu0 0.0
      %1404 = vmatpush1.msra.mxu0 0.0
      %1405 = vmatprep.subr.mxu0 0.0
      %1406 = vmatpush1.msra.mxu0 0.0
      %1407 = vmatprep.subr.mxu0 0.0
      %1408 = vmatpush1.msra.mxu0 0.0
      %1409 = vmatprep.subr.mxu0 0.0
      %1410 = vmatpush1.msra.mxu0 0.0
      %1411 = vmatprep.subr.mxu0 0.0
      %1412 = vmatpush1.msra.mxu0 0.0
      %1413 = vmatprep.subr.mxu0 0.0
      %1414 = vmatpush1.msra.mxu0 0.0
      %1415 = vmatprep.subr.mxu0 0.0
      %1416 = vmatpush1.msra.mxu0 0.0
      %1417 = vmatprep.mubr.f32.mxu0 %v1258
      %1418 = vmatmul.mubr.f32.gmra.mrb[0].mxu0 %v806
      %v1419 = vpop.f32.mrb[0].mxu0
      %v1420 = vadd.f32 %v1099, %v1419
      %v1421 = vpop.f32.mrb[0].mxu0
      %1422 = vmatprep.mubr.f32.mxu0 %v1261
      %1423 = vmatmul.mubr.f32.gmra.mrb[0].mxu0 %v808
      %v1424 = vpop.f32.mrb[0].mxu0
      %v1425 = vadd.f32 %v1104, %v1424
      %v1426 = vpop.f32.mrb[0].mxu0
      %1427 = vmatprep.mubr.f32.mxu0 %v1264
      %1428 = vmatmul.mubr.f32.gmra.mrb[0].mxu0 %v810
      %v1429 = vpop.f32.mrb[0].mxu0
      %v1430 = vadd.f32 %v1109, %v1429
      %v1431 = vpop.f32.mrb[0].mxu0
      %1432 = vmatprep.mubr.f32.mxu0 %v1267
      %1433 = vmatmul.mubr.f32.gmra.mrb[0].mxu0 %v812
      %v1434 = vpop.f32.mrb[0].mxu0
      %v1435 = vadd.f32 %v1114, %v1434
      %v1436 = vpop.f32.mrb[0].mxu0
      %1437 = vmatprep.mubr.f32.mxu0 %v1270
      %1438 = vmatmul.mubr.f32.gmra.mrb[0].mxu0 %v814
      %v1439 = vpop.f32.mrb[0].mxu0
      %v1440 = vadd.f32 %v1119, %v1439
      %v1441 = vpop.f32.mrb[0].mxu0
      %1442 = vmatprep.mubr.f32.mxu0 %v1273
      %1443 = vmatmul.mubr.f32.gmra.mrb[0].mxu0 %v816
      %v1444 = vpop.f32.mrb[0].mxu0
      %v1445 = vadd.f32 %v1124, %v1444
      %v1446 = vpop.f32.mrb[0].mxu0
      %1447 = vmatprep.mubr.f32.mxu0 %v1276
      %1448 = vmatmul.mubr.f32.gmra.mrb[0].mxu0 %v818
      %v1449 = vpop.f32.mrb[0].mxu0
      %v1450 = vadd.f32 %v1129, %v1449
      %v1451 = vpop.f32.mrb[0].mxu0
      %1452 = vmatprep.mubr.f32.mxu0 %v1279
      %1453 = vmatmul.mubr.f32.gmra.mrb[0].mxu0 %v820
      %v1454 = vpop.f32.mrb[0].mxu0
      %v1455 = vadd.f32 %v1134, %v1454
      %v1456 = vpop.f32.mrb[0].mxu0
      %1457 = vmatprep.mubr.f32.mxu0 %v1282
      %1458 = vmatmul.mubr.f32.gmra.mrb[0].mxu0 %v822
      %v1459 = vpop.f32.mrb[0].mxu0
      %v1460 = vadd.f32 %v1139, %v1459
      %v1461 = vpop.f32.mrb[0].mxu0
      %1462 = vmatprep.mubr.f32.mxu0 %v1285
      %1463 = vmatmul.mubr.f32.gmra.mrb[0].mxu0 %v824
      %v1464 = vpop.f32.mrb[0].mxu0
      %v1465 = vadd.f32 %v1144, %v1464
      %v1466 = vpop.f32.mrb[0].mxu0
      %1467 = vmatprep.mubr.f32.mxu0 %v1288
      %1468 = vmatmul.mubr.f32.gmra.mrb[0].mxu0 %v826
      %v1469 = vpop.f32.mrb[0].mxu0
      %v1470 = vadd.f32 %v1149, %v1469
      %v1471 = vpop.f32.mrb[0].mxu0
      %1472 = vmatprep.mubr.f32.mxu0 %v1291
      %1473 = vmatmul.mubr.f32.gmra.mrb[0].mxu0 %v828
      %v1474 = vpop.f32.mrb[0].mxu0
      %v1475 = vadd.f32 %v1154, %v1474
      %v1476 = vpop.f32.mrb[0].mxu0
      %1477 = vmatprep.mubr.f32.mxu0 %v1294
      %1478 = vmatmul.mubr.f32.gmra.mrb[0].mxu0 %v830
      %v1479 = vpop.f32.mrb[0].mxu0
      %v1480 = vadd.f32 %v1159, %v1479
      %v1481 = vpop.f32.mrb[0].mxu0
      %1482 = vmatprep.mubr.f32.mxu0 %v1297
      %1483 = vmatmul.mubr.f32.gmra.mrb[0].mxu0 %v832
      %v1484 = vpop.f32.mrb[0].mxu0
      %v1485 = vadd.f32 %v1164, %v1484
      %v1486 = vpop.f32.mrb[0].mxu0
      %1487 = vmatprep.mubr.f32.mxu0 %v1300
      %1488 = vmatmul.mubr.f32.gmra.mrb[0].mxu0 %v834
      %v1489 = vpop.f32.mrb[0].mxu0
      %v1490 = vadd.f32 %v1169, %v1489
      %v1491 = vpop.f32.mrb[0].mxu0
      %1492 = vmatprep.mubr.f32.mxu0 %v1303
      %1493 = vmatmul.mubr.f32.gmra.mrb[0].mxu0 %v836
      %v1494 = vpop.f32.mrb[0].mxu0
      %v1495 = vadd.f32 %v1174, %v1494
      %v1496 = vpop.f32.mrb[0].mxu0
      %1497 = vmatprep.mubr.f32.mxu0 %v1306
      %1498 = vmatmul.mubr.f32.gmra.mrb[0].mxu0 %v838
      %v1499 = vpop.f32.mrb[0].mxu0
      %v1500 = vadd.f32 %v1179, %v1499
      %v1501 = vpop.f32.mrb[0].mxu0
      %1502 = vmatprep.mubr.f32.mxu0 %v1309
      %1503 = vmatmul.mubr.f32.gmra.mrb[0].mxu0 %v840
      %v1504 = vpop.f32.mrb[0].mxu0
      %v1505 = vadd.f32 %v1184, %v1504
      %v1506 = vpop.f32.mrb[0].mxu0
      %1507 = vmatprep.mubr.f32.mxu0 %v1312
      %1508 = vmatmul.mubr.f32.gmra.mrb[0].mxu0 %v842
      %v1509 = vpop.f32.mrb[0].mxu0
      %v1510 = vadd.f32 %v1189, %v1509
      %v1511 = vpop.f32.mrb[0].mxu0
      %1512 = vmatprep.mubr.f32.mxu0 %v1315
      %1513 = vmatmul.mubr.f32.gmra.mrb[0].mxu0 %v844
      %v1514 = vpop.f32.mrb[0].mxu0
      %v1515 = vadd.f32 %v1194, %v1514
      %v1516 = vpop.f32.mrb[0].mxu0
      %1517 = vmatprep.mubr.f32.mxu0 %v1318
      %1518 = vmatmul.mubr.f32.gmra.mrb[0].mxu0 %v846
      %v1519 = vpop.f32.mrb[0].mxu0
      %v1520 = vadd.f32 %v1199, %v1519
      %v1521 = vpop.f32.mrb[0].mxu0
      %1522 = vmatprep.mubr.f32.mxu0 %v1321
      %1523 = vmatmul.mubr.f32.gmra.mrb[0].mxu0 %v848
      %v1524 = vpop.f32.mrb[0].mxu0
      %v1525 = vadd.f32 %v1204, %v1524
      %v1526 = vpop.f32.mrb[0].mxu0
      %1527 = vmatprep.mubr.f32.mxu0 %v1324
      %1528 = vmatmul.mubr.f32.gmra.mrb[0].mxu0 %v850
      %v1529 = vpop.f32.mrb[0].mxu0
      %v1530 = vadd.f32 %v1209, %v1529
      %v1531 = vpop.f32.mrb[0].mxu0
      %1532 = vmatprep.mubr.f32.mxu0 %v1327
      %1533 = vmatmul.mubr.f32.gmra.mrb[0].mxu0 %v852
      %v1534 = vpop.f32.mrb[0].mxu0
      %v1535 = vadd.f32 %v1214, %v1534
      %v1536 = vpop.f32.mrb[0].mxu0
      %1537 = vmatprep.mubr.f32.mxu0 %v1330
      %1538 = vmatmul.mubr.f32.gmra.mrb[0].mxu0 %v854
      %v1539 = vpop.f32.mrb[0].mxu0
      %v1540 = vadd.f32 %v1219, %v1539
      %v1541 = vpop.f32.mrb[0].mxu0
      %1542 = vmatprep.mubr.f32.mxu0 %v1333
      %1543 = vmatmul.mubr.f32.gmra.mrb[0].mxu0 %v856
      %v1544 = vpop.f32.mrb[0].mxu0
      %v1545 = vadd.f32 %v1224, %v1544
      %v1546 = vpop.f32.mrb[0].mxu0
      %1547 = vmatprep.mubr.f32.mxu0 %v1336
      %1548 = vmatmul.mubr.f32.gmra.mrb[0].mxu0 %v858
      %v1549 = vpop.f32.mrb[0].mxu0
      %v1550 = vadd.f32 %v1229, %v1549
      %v1551 = vpop.f32.mrb[0].mxu0
      %1552 = vmatprep.mubr.f32.mxu0 %v1339
      %1553 = vmatmul.mubr.f32.gmra.mrb[0].mxu0 %v860
      %v1554 = vpop.f32.mrb[0].mxu0
      %v1555 = vadd.f32 %v1234, %v1554
      %v1556 = vpop.f32.mrb[0].mxu0
      %1557 = vmatprep.mubr.f32.mxu0 %v1342
      %1558 = vmatmul.mubr.f32.gmra.mrb[0].mxu0 %v862
      %v1559 = vpop.f32.mrb[0].mxu0
      %v1560 = vadd.f32 %v1239, %v1559
      %v1561 = vpop.f32.mrb[0].mxu0
      %1562 = vmatprep.mubr.f32.mxu0 %v1345
      %1563 = vmatmul.mubr.f32.gmra.mrb[0].mxu0 %v864
      %v1564 = vpop.f32.mrb[0].mxu0
      %v1565 = vadd.f32 %v1244, %v1564
      %v1566 = vpop.f32.mrb[0].mxu0
      %1567 = vmatprep.mubr.f32.mxu0 %v1348
      %1568 = vmatmul.mubr.f32.gmra.mrb[0].mxu0 %v866
      %v1569 = vpop.f32.mrb[0].mxu0
      %v1570 = vadd.f32 %v1249, %v1569
      %v1571 = vpop.f32.mrb[0].mxu0
      %1572 = vmatprep.mubr.f32.mxu0 %v1351
      %1573 = vmatmul.mubr.f32.gmra.mrb[0].mxu0 %v868
      %v1574 = vpop.f32.mrb[0].mxu0
      %v1575 = vadd.f32 %v1254, %v1574
      %v1576 = vpop.f32.mrb[0].mxu0
      %1577 = vdwg.mxu0
      %vm1578 = vcmask 31744
      %1579 = vst.msk [vmem:[%s245] sm:$0xff] %vm1578, %v1420
      %1580 = vst.msk [vmem:[%s245 + $0x8] sm:$0xff] %vm1578, %v1425
      %1581 = vst.msk [vmem:[%s245 + $0x10] sm:$0xff] %vm1578, %v1430
      %1582 = vst.msk [vmem:[%s245 + $0x18] sm:$0xff] %vm1578, %v1435
      %1583 = vst.msk [vmem:[%s245 + $0x20] sm:$0xff] %vm1578, %v1440
      %1584 = vst.msk [vmem:[%s245 + $0x28] sm:$0xff] %vm1578, %v1445
      %1585 = vst.msk [vmem:[%s245 + $0x30] sm:$0xff] %vm1578, %v1450
      %1586 = vst.msk [vmem:[%s245 + $0x38] sm:$0xff] %vm1578, %v1455
      %1587 = vst.msk [vmem:[%s245 + $0x40] sm:$0xff] %vm1578, %v1460
      %1588 = vst.msk [vmem:[%s245 + $0x48] sm:$0xff] %vm1578, %v1465
      %1589 = vst.msk [vmem:[%s245 + $0x50] sm:$0xff] %vm1578, %v1470
      %1590 = vst.msk [vmem:[%s245 + $0x58] sm:$0xff] %vm1578, %v1475
      %1591 = vst.msk [vmem:[%s245 + $0x60] sm:$0xff] %vm1578, %v1480
      %1592 = vst.msk [vmem:[%s245 + $0x68] sm:$0xff] %vm1578, %v1485
      %1593 = vst.msk [vmem:[%s245 + $0x70] sm:$0xff] %vm1578, %v1490
      %1594 = vst.msk [vmem:[%s245 + $0x78] sm:$0xff] %vm1578, %v1495
      %1595 = vst.msk [vmem:[%s245 + $0x80] sm:$0xff] %vm1578, %v1500
      %1596 = vst.msk [vmem:[%s245 + $0x88] sm:$0xff] %vm1578, %v1505
      %1597 = vst.msk [vmem:[%s245 + $0x90] sm:$0xff] %vm1578, %v1510
      %1598 = vst.msk [vmem:[%s245 + $0x98] sm:$0xff] %vm1578, %v1515
      %1599 = vst.msk [vmem:[%s245 + $0xa0] sm:$0xff] %vm1578, %v1520
      %1600 = vst.msk [vmem:[%s245 + $0xa8] sm:$0xff] %vm1578, %v1525
      %1601 = vst.msk [vmem:[%s245 + $0xb0] sm:$0xff] %vm1578, %v1530
      %1602 = vst.msk [vmem:[%s245 + $0xb8] sm:$0xff] %vm1578, %v1535
      %1603 = vst.msk [vmem:[%s245 + $0xc0] sm:$0xff] %vm1578, %v1540
      %1604 = vst.msk [vmem:[%s245 + $0xc8] sm:$0xff] %vm1578, %v1545
      %1605 = vst.msk [vmem:[%s245 + $0xd0] sm:$0xff] %vm1578, %v1550
      %1606 = vst.msk [vmem:[%s245 + $0xd8] sm:$0xff] %vm1578, %v1555
      %1607 = vst.msk [vmem:[%s245 + $0xe0] sm:$0xff] %vm1578, %v1560
      %1608 = vst.msk [vmem:[%s245 + $0xe8] sm:$0xff] %vm1578, %v1565
      %1609 = vst.msk [vmem:[%s245 + $0xf0] sm:$0xff] %vm1578, %v1570
      %1610 = vst.msk [vmem:[%s245 + $0xf8] sm:$0xff] %vm1578, %v1575
      %p1611 = scmp.lt.s32.totalorder %s20, 1
      %s1612 = scalar_select %p1611, %s20, 1
      %p1613 = scmp.lt.s32.totalorder %s19, 0
      %s1614 = scalar_select %p1613, %s19, 0
      %s1615 = smul.addr %s1612, 32
      %s1616 = sadd.s32 %s1614, %s1615
      %s1617 = smul.addr %s1616, 8
      %s1618 = scalar_lea.vmem %s4, %s1617
      // Predicated region
      $region37: #{tpu_custom_call.1} parent=35 // pred_check
        %p1619 = pneg %p143
      $region38: #{tpu_custom_call.1} parent=35 // pred_check_branch
        %1621 = sbr.rel (%p1619) target = $region40
      $region39: #{tpu_custom_call.1} parent=35 // pred_region
        _
      $region40: #{tpu_custom_call.1} parent=35 // pred_fallthru
        _
    $region36: #{tpu_custom_call.1} parent=5 // pred_fallthru
      _
    %p1622 = scmp.le.s32.totalorder 2, %s10
    // Predicated region
    $region41: #{tpu_custom_call.1} parent=5 // pred_check
      %p1623 = pneg %p1622
    $region42: #{tpu_custom_call.1} parent=5 // pred_check_branch
      %1625 = sbr.rel (%p1623) target = $region44
    $region43: #{tpu_custom_call.1} parent=5 // pred_region
      %s1626 = ssub.s32 %s10, 2
      // Predicated region
      $region45: #{tpu_custom_call.1} parent=43 // pred_check
        %p1627 = pneg %p149
      $region46: #{tpu_custom_call.1} parent=43 // pred_check_branch
        %1629 = sbr.rel (%p1627) target = $region48
      $region47: #{tpu_custom_call.1} parent=43 // pred_region
        %p1630 = scmp.lt.s32.totalorder %s22, 1
        %s1631 = scalar_select %p1630, %s22, 1
        %p1632 = scmp.lt.s32.totalorder %s21, 0
        %s1633 = scalar_select %p1632, %s21, 0
        %s1634 = smul.addr %s1631, 32
        %s1635 = sadd.s32 %s1633, %s1634
        %s1636 = smul.addr %s1635, 8
        %s1637 = scalar_lea.vmem %s4, %s1636
      $region48: #{tpu_custom_call.1} parent=43 // pred_fallthru
        _
    $region44: #{tpu_custom_call.1} parent=5 // pred_fallthru
      _
  $region6: #{tpu_custom_call.1} parent=0 // loop_footer
    %s14 = sadd.s32 1, %s10
  $region7: #{tpu_custom_call.1} parent=0 // loop_footer_branch
    %9 = sbr.rel target = $region3
  $region8: #{tpu_custom_call.1} parent=0 // loop_exit
    _

</llo_original>
